<compile_context>
chip_gen: v6e
topology: v6e:2x2x1
jax: 0.10.0
libtpu: 0.0.40
codegen_flags: <defaults>
</compile_context>

<pallas_src>
import jax
import jax.numpy as jnp
import numpy as np
from jax import lax
from jax.experimental import pallas as pl
from jax.experimental.pallas import tpu as pltpu


# --------------------------- fused decoder kernel -----------------------------
def _make_decoder_kernel(T, B, E, H, V):
    """Kernel over time-major rows: row index = t * B + b."""
    TB = T * B
    # Buffer this many consecutive steps of h so hidden-state stores are full
    # (8, lane) sublane tiles (falls back to per-step stores otherwise).
    group = (8 // B) if (B <= 8 and 8 % B == 0) else 1

    def kernel(ids_ref, emb_ref, wih_ref, whh_ref, h0_ref, c0_ref,
               wsc_ref, bsc_ref, lp_ref, hn_ref, cn_ref, gx_s, hs_s):
        # ---- Phase 0: in-kernel embedding lookup (one-hot @ table on MXU) ---
        ids = ids_ref[...]                                        # [TB, 1] int32
        onehot = (lax.broadcasted_iota(jnp.int32, (TB, V), 1) == ids
                  ).astype(jnp.float32)                           # [TB, V]
        x = jnp.dot(onehot, emb_ref[...],
                    preferred_element_type=jnp.float32)           # [TB, E]

        # ---- Phase 1: hoisted fused input projection (off the serial path) --
        # Single [TB, E] @ [E, 4H] matmul; lane-dense N = 4H output slab.
        gx_s[...] = jnp.dot(x, wih_ref[...],
                            preferred_element_type=jnp.float32)   # [TB, 4H]

        # ---- Phase 2: recurrence (one fused h @ W_hh [B,4H] per step) -------
        h = h0_ref[...]                                           # [B, H]
        c = c0_ref[...]                                           # [B, H]
        whh = whh_ref[...]                                        # [H, 4H]  (loaded once)
        h_group = []
        for t in range(T):          # static full unroll (tiny static T)
            r0 = t * B
            pre = gx_s[pl.ds(r0, B), :] + jnp.dot(
                h, whh, preferred_element_type=jnp.float32)       # [B, 4H]
            # Two EUP passes over the lane-dense pre-activation, then static
            # lane slices (XLU) for the individual gates.
            sig = jax.nn.sigmoid(pre)
            tnh = jnp.tanh(pre)
            i_g = sig[:, 0:H]
            f_g = sig[:, H:2 * H]
            g_g = tnh[:, 2 * H:3 * H]
            o_g = sig[:, 3 * H:4 * H]
            c = f_g * c + i_g * g_g
            h = o_g * jnp.tanh(c)
            h_group.append(h)
            if len(h_group) == group or t == T - 1:
                rows = len(h_group) * B
                start = (t + 1) * B - rows
                hs_s[pl.ds(start, rows), :] = jnp.concatenate(h_group, axis=0)
                h_group = []
        hn_ref[...] = h
        cn_ref[...] = c

        # ---- Phase 3: fused scorer (Linear + LogSoftmax) epilogue -----------
        # Operates on the VMEM-resident [TB, H] slab; single store of the full
        # [TB, V] log-prob slab.
        logits = (jnp.dot(hs_s[...], wsc_ref[...],
                          preferred_element_type=jnp.float32) + bsc_ref[...])
        m = jnp.max(logits, axis=-1, keepdims=True)
        z = logits - m
        lse = jnp.log(jnp.sum(jnp.exp(z), axis=-1, keepdims=True))
        lp_ref[...] = z - lse

    return kernel


def _decoder_call(ids2d, embedding, w_ih, w_hh, h0, c0, w_score, b_score, *, T, B):
    """ids2d: [T*B, 1] int32 time-major row ids.

    Returns (logprobs [T*B, V], hn [B, H], cn [B, H])."""
    TB = T * B
    V, E = embedding.shape
    H = h0.shape[-1]
    H4 = w_hh.shape[1]
    kern = _make_decoder_kernel(T, B, E, H, V)
    return pl.pallas_call(
        kern,
        out_shape=(
            jax.ShapeDtypeStruct((TB, V), jnp.float32),
            jax.ShapeDtypeStruct((B, H), jnp.float32),
            jax.ShapeDtypeStruct((B, H), jnp.float32),
        ),
        grid_spec=pltpu.PrefetchScalarGridSpec(
            num_scalar_prefetch=0,
            grid=(1,),                                   # single invocation
            in_specs=[
                pl.BlockSpec((TB, 1), lambda i: (0, 0)),        # ids (time-major)
                pl.BlockSpec((V, E), lambda i: (0, 0)),         # embedding table
                pl.BlockSpec((E, H4), lambda i: (0, 0)),        # W_ih (gates on lanes)
                pl.BlockSpec((H, H4), lambda i: (0, 0)),        # W_hh (gates on lanes)
                pl.BlockSpec((B, H), lambda i: (0, 0)),         # h0
                pl.BlockSpec((B, H), lambda i: (0, 0)),         # c0
                pl.BlockSpec((H, V), lambda i: (0, 0)),         # W_score
                pl.BlockSpec((1, V), lambda i: (0, 0)),         # b_score
            ],
            out_specs=(
                pl.BlockSpec((TB, V), lambda i: (0, 0)),        # logprobs
                pl.BlockSpec((B, H), lambda i: (0, 0)),         # hn
                pl.BlockSpec((B, H), lambda i: (0, 0)),         # cn
            ),
            scratch_shapes=[
                pltpu.VMEM((TB, H4), jnp.float32),              # gx slab (hoisted)
                pltpu.VMEM((TB, H), jnp.float32),               # hidden-state slab
            ],
        ),
        compiler_params=pltpu.CompilerParams(
            dimension_semantics=("arbitrary",)),
    )(ids2d, embedding, w_ih, w_hh, h0, c0, w_score, b_score)


# ----------------------------- DecoderRNN forward -----------------------------
def decoder_rnn_forward(params, input_ids, h0, c0):
    """input_ids: [B, T] int32; h0, c0: [1, B, H] (PyTorch LSTM convention).

    Returns (logprobs [B, T, V], hn [1, B, H], cn [1, B, H]).
    """
    B, T = input_ids.shape
    V = params["embedding"].shape[0]
    # Time-major row ids: row r = t * B + b (only a tiny int column goes to HBM;
    # the embedding lookup itself happens inside the kernel).
    ids2d = input_ids.T.reshape(T * B, 1).astype(jnp.int32)
    lp2d, hn, cn = _decoder_call(
        ids2d, params["embedding"], params["w_ih"], params["w_hh"],
        h0[0], c0[0], params["w_score"], params["b_score"], T=T, B=B)
    logprobs = jnp.transpose(lp2d.reshape(T, B, V), (1, 0, 2))   # batch_first
    return logprobs, hn[None], cn[None]


# ----------------------------- pure-JAX reference -----------------------------
def reference_forward(params, input_ids, h0, c0):
    emb = params["embedding"][input_ids]                          # [B, T, E]
    H = h0.shape[-1]
    w_ih, w_hh = params["w_ih"], params["w_hh"]                   # [E,4H], [H,4H]

    def step(carry, x_t):
        h, c = carry
        pre = x_t @ w_ih + h @ w_hh                               # [B, 4H]
        i = jax.nn.sigmoid(pre[:, 0:H])
        f = jax.nn.sigmoid(pre[:, H:2 * H])
        g = jnp.tanh(pre[:, 2 * H:3 * H])
        o = jax.nn.sigmoid(pre[:, 3 * H:4 * H])
        c = f * c + i * g
        h = o * jnp.tanh(c)
        return (h, c), h

    (hn, cn), out = jax.lax.scan(step, (h0[0], c0[0]),
                                 jnp.transpose(emb, (1, 0, 2)))
    out_bth = jnp.transpose(out, (1, 0, 2))                       # [B, T, H]
    logits = out_bth @ params["w_score"] + params["b_score"][0]
    return jax.nn.log_softmax(logits, axis=-1), hn[None], cn[None]


# ----------------------------------- main -------------------------------------
if __name__ == "__main__":
    B, T, E, H, V = 2, 8, 16, 32, 16   # batch, seq, embed_dim, hidden_dim, vocab

    key = jax.random.PRNGKey(0)
    keys = jax.random.split(key, 8)
    scale = 0.1
    params = {
        "embedding": scale * jax.random.normal(keys[0], (V, E), jnp.float32),
        # fused gate layout, PyTorch gate order (i, f, g, o) along lanes
        "w_ih":      scale * jax.random.normal(keys[1], (E, 4 * H), jnp.float32),
        "w_hh":      scale * jax.random.normal(keys[2], (H, 4 * H), jnp.float32),
        "w_score":   scale * jax.random.normal(keys[3], (H, V), jnp.float32),
        "b_score":   scale * jax.random.normal(keys[4], (1, V), jnp.float32),
    }
    input_ids = jax.random.randint(keys[5], (B, T), 0, V, jnp.int32)
    h0 = scale * jax.random.normal(keys[6], (1, B, H), jnp.float32)
    c0 = scale * jax.random.normal(keys[7], (1, B, H), jnp.float32)

    logprobs, hn, cn = decoder_rnn_forward(params, input_ids, h0, c0)
    jax.block_until_ready((logprobs, hn, cn))

    ref_lp, ref_hn, ref_cn = reference_forward(params, input_ids, h0, c0)
    np.testing.assert_allclose(np.asarray(logprobs), np.asarray(ref_lp),
                               atol=2e-3, rtol=2e-3)
    np.testing.assert_allclose(np.asarray(hn), np.asarray(ref_hn),
                               atol=2e-3, rtol=2e-3)
    np.testing.assert_allclose(np.asarray(cn), np.asarray(ref_cn),
                               atol=2e-3, rtol=2e-3)

    assert logprobs.shape == (B, T, V)
    assert hn.shape == (1, B, H) and cn.shape == (1, B, H)
    print("KERNEL_OK")
</pallas_src>

<mosaic_0001>
module attributes {stable_mosaic.version = 11 : i64} {
  func.func @kernel(%arg0: i32, %arg1: memref<16x1xi32, #tpu.memory_space<vmem>>, %arg2: memref<16x16xf32, #tpu.memory_space<vmem>>, %arg3: memref<16x128xf32, #tpu.memory_space<vmem>>, %arg4: memref<32x128xf32, #tpu.memory_space<vmem>>, %arg5: memref<2x32xf32, #tpu.memory_space<vmem>>, %arg6: memref<2x32xf32, #tpu.memory_space<vmem>>, %arg7: memref<32x16xf32, #tpu.memory_space<vmem>>, %arg8: memref<1x16xf32, #tpu.memory_space<vmem>>, %arg9: memref<16x16xf32, #tpu.memory_space<vmem>>, %arg10: memref<2x32xf32, #tpu.memory_space<vmem>>, %arg11: memref<2x32xf32, #tpu.memory_space<vmem>>, %arg12: memref<16x128xf32, #tpu.memory_space<vmem>>, %arg13: memref<16x32xf32, #tpu.memory_space<vmem>>) attributes {dimension_semantics = [#tpu.dimension_semantics<arbitrary>], iteration_bounds = array<i64: 1>, scalar_prefetch = 0 : i64, scratch_operands = 2 : i64, tpu.core_type = #tpu.core_type<tc>, window_params = [{pipeline_mode = #tpu.pipeline_mode<synchronous>, transform_indices = @transform_0, window_bounds = array<i64: 16, 1>}, {pipeline_mode = #tpu.pipeline_mode<synchronous>, transform_indices = @transform_1, window_bounds = array<i64: 16, 16>}, {pipeline_mode = #tpu.pipeline_mode<synchronous>, transform_indices = @transform_2, window_bounds = array<i64: 16, 128>}, {pipeline_mode = #tpu.pipeline_mode<synchronous>, transform_indices = @transform_3, window_bounds = array<i64: 32, 128>}, {pipeline_mode = #tpu.pipeline_mode<synchronous>, transform_indices = @transform_4, window_bounds = array<i64: 2, 32>}, {pipeline_mode = #tpu.pipeline_mode<synchronous>, transform_indices = @transform_5, window_bounds = array<i64: 2, 32>}, {pipeline_mode = #tpu.pipeline_mode<synchronous>, transform_indices = @transform_6, window_bounds = array<i64: 32, 16>}, {pipeline_mode = #tpu.pipeline_mode<synchronous>, transform_indices = @transform_7, window_bounds = array<i64: 1, 16>}, {pipeline_mode = #tpu.pipeline_mode<synchronous>, transform_indices = @transform_8, window_bounds = array<i64: 16, 16>}, {pipeline_mode = #tpu.pipeline_mode<synchronous>, transform_indices = @transform_9, window_bounds = array<i64: 2, 32>}, {pipeline_mode = #tpu.pipeline_mode<synchronous>, transform_indices = @transform_10, window_bounds = array<i64: 2, 32>}]} {
    %c0 = arith.constant 0 : index
    %c0_0 = arith.constant 0 : index
    %0 = vector.load %arg1[%c0, %c0_0] : memref<16x1xi32, #tpu.memory_space<vmem>>, vector<16x1xi32>
    %1 = tpu.iota {dimensions = array<i32: 1>} : vector<16x16xi32>
    %2 = vector.broadcast %0 : vector<16x1xi32> to vector<16x16xi32>
    %3 = arith.cmpi eq, %1, %2 : vector<16x16xi32>
    %4 = arith.extui %3 : vector<16x16xi1> to vector<16x16xi32>
    %5 = arith.sitofp %4 : vector<16x16xi32> to vector<16x16xf32>
    %c0_1 = arith.constant 0 : index
    %c0_2 = arith.constant 0 : index
    %6 = vector.load %arg2[%c0_1, %c0_2] : memref<16x16xf32, #tpu.memory_space<vmem>>, vector<16x16xf32>
    %cst = arith.constant dense<0.000000e+00> : vector<16x16xf32>
    %7 = tpu.matmul %5, %6, %cst {dimension_numbers = #tpu.dot_dimension_numbers<[1], [0], [0], [1], [0, 0, 1, 1], [], []>} : vector<16x16xf32>, vector<16x16xf32>, vector<16x16xf32> -> vector<16x16xf32>
    %c0_3 = arith.constant 0 : index
    %c0_4 = arith.constant 0 : index
    %8 = vector.load %arg3[%c0_3, %c0_4] : memref<16x128xf32, #tpu.memory_space<vmem>>, vector<16x128xf32>
    %cst_5 = arith.constant dense<0.000000e+00> : vector<16x128xf32>
    %9 = tpu.matmul %7, %8, %cst_5 {dimension_numbers = #tpu.dot_dimension_numbers<[1], [0], [0], [1], [0, 0, 1, 1], [], []>} : vector<16x16xf32>, vector<16x128xf32>, vector<16x128xf32> -> vector<16x128xf32>
    %c0_6 = arith.constant 0 : index
    %c0_7 = arith.constant 0 : index
    %10 = vector.load %arg12[%c0_6, %c0_7] : memref<16x128xf32, #tpu.memory_space<vmem>>, vector<16x128xf32>
    tpu.vector_store %arg12[%c0_6, %c0_7], %9 {strides = array<i32>} : memref<16x128xf32, #tpu.memory_space<vmem>>, vector<16x128xf32>,
    %c0_8 = arith.constant 0 : index
    %c0_9 = arith.constant 0 : index
    %11 = vector.load %arg5[%c0_8, %c0_9] : memref<2x32xf32, #tpu.memory_space<vmem>>, vector<2x32xf32>
    %c0_10 = arith.constant 0 : index
    %c0_11 = arith.constant 0 : index
    %12 = vector.load %arg6[%c0_10, %c0_11] : memref<2x32xf32, #tpu.memory_space<vmem>>, vector<2x32xf32>
    %c0_12 = arith.constant 0 : index
    %c0_13 = arith.constant 0 : index
    %13 = vector.load %arg4[%c0_12, %c0_13] : memref<32x128xf32, #tpu.memory_space<vmem>>, vector<32x128xf32>
    %c0_14 = arith.constant 0 : index
    %c0_15 = arith.constant 0 : index
    %14 = vector.load %arg12[%c0_14, %c0_15] : memref<16x128xf32, #tpu.memory_space<vmem>>, vector<2x128xf32>
    %cst_16 = arith.constant dense<0.000000e+00> : vector<2x128xf32>
    %15 = tpu.matmul %11, %13, %cst_16 {dimension_numbers = #tpu.dot_dimension_numbers<[1], [0], [0], [1], [0, 0, 1, 1], [], []>} : vector<2x32xf32>, vector<32x128xf32>, vector<2x128xf32> -> vector<2x128xf32>
    %16 = arith.addf %14, %15 : vector<2x128xf32>
    %17 = arith.negf %16 : vector<2x128xf32>
    %18 = math.exp %17 : vector<2x128xf32>
    %cst_17 = arith.constant 1.000000e+00 : f32
    %19 = vector.broadcast %cst_17 : f32 to vector<2x128xf32>
    %20 = arith.addf %19, %18 : vector<2x128xf32>
    %21 = arith.divf %19, %20 : vector<2x128xf32>
    %22 = math.tanh %16 : vector<2x128xf32>
    %23 = vector.extract_strided_slice %21 {offsets = [0, 0], sizes = [2, 32], strides = [1, 1]} : vector<2x128xf32> to vector<2x32xf32>
    %24 = vector.extract_strided_slice %21 {offsets = [0, 32], sizes = [2, 32], strides = [1, 1]} : vector<2x128xf32> to vector<2x32xf32>
    %25 = vector.extract_strided_slice %22 {offsets = [0, 64], sizes = [2, 32], strides = [1, 1]} : vector<2x128xf32> to vector<2x32xf32>
    %26 = vector.extract_strided_slice %21 {offsets = [0, 96], sizes = [2, 32], strides = [1, 1]} : vector<2x128xf32> to vector<2x32xf32>
    %27 = arith.mulf %24, %12 : vector<2x32xf32>
    %28 = arith.mulf %23, %25 : vector<2x32xf32>
    %29 = arith.addf %27, %28 : vector<2x32xf32>
    %30 = math.tanh %29 : vector<2x32xf32>
    %31 = arith.mulf %26, %30 : vector<2x32xf32>
    %c2 = arith.constant 2 : index
    %c0_18 = arith.constant 0 : index
    %32 = vector.load %arg12[%c2, %c0_18] : memref<16x128xf32, #tpu.memory_space<vmem>>, vector<2x128xf32>
    %cst_19 = arith.constant dense<0.000000e+00> : vector<2x128xf32>
    %33 = tpu.matmul %31, %13, %cst_19 {dimension_numbers = #tpu.dot_dimension_numbers<[1], [0], [0], [1], [0, 0, 1, 1], [], []>} : vector<2x32xf32>, vector<32x128xf32>, vector<2x128xf32> -> vector<2x128xf32>
    %34 = arith.addf %32, %33 : vector<2x128xf32>
    %35 = arith.negf %34 : vector<2x128xf32>
    %36 = math.exp %35 : vector<2x128xf32>
    %cst_20 = arith.constant 1.000000e+00 : f32
    %37 = vector.broadcast %cst_20 : f32 to vector<2x128xf32>
    %38 = arith.addf %37, %36 : vector<2x128xf32>
    %39 = arith.divf %37, %38 : vector<2x128xf32>
    %40 = math.tanh %34 : vector<2x128xf32>
    %41 = vector.extract_strided_slice %39 {offsets = [0, 0], sizes = [2, 32], strides = [1, 1]} : vector<2x128xf32> to vector<2x32xf32>
    %42 = vector.extract_strided_slice %39 {offsets = [0, 32], sizes = [2, 32], strides = [1, 1]} : vector<2x128xf32> to vector<2x32xf32>
    %43 = vector.extract_strided_slice %40 {offsets = [0, 64], sizes = [2, 32], strides = [1, 1]} : vector<2x128xf32> to vector<2x32xf32>
    %44 = vector.extract_strided_slice %39 {offsets = [0, 96], sizes = [2, 32], strides = [1, 1]} : vector<2x128xf32> to vector<2x32xf32>
    %45 = arith.mulf %42, %29 : vector<2x32xf32>
    %46 = arith.mulf %41, %43 : vector<2x32xf32>
    %47 = arith.addf %45, %46 : vector<2x32xf32>
    %48 = math.tanh %47 : vector<2x32xf32>
    %49 = arith.mulf %44, %48 : vector<2x32xf32>
    %c4 = arith.constant 4 : index
    %c0_21 = arith.constant 0 : index
    %50 = vector.load %arg12[%c4, %c0_21] : memref<16x128xf32, #tpu.memory_space<vmem>>, vector<2x128xf32>
    %cst_22 = arith.constant dense<0.000000e+00> : vector<2x128xf32>
    %51 = tpu.matmul %49, %13, %cst_22 {dimension_numbers = #tpu.dot_dimension_numbers<[1], [0], [0], [1], [0, 0, 1, 1], [], []>} : vector<2x32xf32>, vector<32x128xf32>, vector<2x128xf32> -> vector<2x128xf32>
    %52 = arith.addf %50, %51 : vector<2x128xf32>
    %53 = arith.negf %52 : vector<2x128xf32>
    %54 = math.exp %53 : vector<2x128xf32>
    %cst_23 = arith.constant 1.000000e+00 : f32
    %55 = vector.broadcast %cst_23 : f32 to vector<2x128xf32>
    %56 = arith.addf %55, %54 : vector<2x128xf32>
    %57 = arith.divf %55, %56 : vector<2x128xf32>
    %58 = math.tanh %52 : vector<2x128xf32>
    %59 = vector.extract_strided_slice %57 {offsets = [0, 0], sizes = [2, 32], strides = [1, 1]} : vector<2x128xf32> to vector<2x32xf32>
    %60 = vector.extract_strided_slice %57 {offsets = [0, 32], sizes = [2, 32], strides = [1, 1]} : vector<2x128xf32> to vector<2x32xf32>
    %61 = vector.extract_strided_slice %58 {offsets = [0, 64], sizes = [2, 32], strides = [1, 1]} : vector<2x128xf32> to vector<2x32xf32>
    %62 = vector.extract_strided_slice %57 {offsets = [0, 96], sizes = [2, 32], strides = [1, 1]} : vector<2x128xf32> to vector<2x32xf32>
    %63 = arith.mulf %60, %47 : vector<2x32xf32>
    %64 = arith.mulf %59, %61 : vector<2x32xf32>
    %65 = arith.addf %63, %64 : vector<2x32xf32>
    %66 = math.tanh %65 : vector<2x32xf32>
    %67 = arith.mulf %62, %66 : vector<2x32xf32>
    %c6 = arith.constant 6 : index
    %c0_24 = arith.constant 0 : index
    %68 = vector.load %arg12[%c6, %c0_24] : memref<16x128xf32, #tpu.memory_space<vmem>>, vector<2x128xf32>
    %cst_25 = arith.constant dense<0.000000e+00> : vector<2x128xf32>
    %69 = tpu.matmul %67, %13, %cst_25 {dimension_numbers = #tpu.dot_dimension_numbers<[1], [0], [0], [1], [0, 0, 1, 1], [], []>} : vector<2x32xf32>, vector<32x128xf32>, vector<2x128xf32> -> vector<2x128xf32>
    %70 = arith.addf %68, %69 : vector<2x128xf32>
    %71 = arith.negf %70 : vector<2x128xf32>
    %72 = math.exp %71 : vector<2x128xf32>
    %cst_26 = arith.constant 1.000000e+00 : f32
    %73 = vector.broadcast %cst_26 : f32 to vector<2x128xf32>
    %74 = arith.addf %73, %72 : vector<2x128xf32>
    %75 = arith.divf %73, %74 : vector<2x128xf32>
    %76 = math.tanh %70 : vector<2x128xf32>
    %77 = vector.extract_strided_slice %75 {offsets = [0, 0], sizes = [2, 32], strides = [1, 1]} : vector<2x128xf32> to vector<2x32xf32>
    %78 = vector.extract_strided_slice %75 {offsets = [0, 32], sizes = [2, 32], strides = [1, 1]} : vector<2x128xf32> to vector<2x32xf32>
    %79 = vector.extract_strided_slice %76 {offsets = [0, 64], sizes = [2, 32], strides = [1, 1]} : vector<2x128xf32> to vector<2x32xf32>
    %80 = vector.extract_strided_slice %75 {offsets = [0, 96], sizes = [2, 32], strides = [1, 1]} : vector<2x128xf32> to vector<2x32xf32>
    %81 = arith.mulf %78, %65 : vector<2x32xf32>
    %82 = arith.mulf %77, %79 : vector<2x32xf32>
    %83 = arith.addf %81, %82 : vector<2x32xf32>
    %84 = math.tanh %83 : vector<2x32xf32>
    %85 = arith.mulf %80, %84 : vector<2x32xf32>
    %86 = tpu.concatenate %31, %49, %67, %85 in 0 : vector<2x32xf32>, vector<2x32xf32>, vector<2x32xf32>, vector<2x32xf32> -> vector<8x32xf32>
    %c0_27 = arith.constant 0 : index
    %c0_28 = arith.constant 0 : index
    %87 = vector.load %arg13[%c0_27, %c0_28] : memref<16x32xf32, #tpu.memory_space<vmem>>, vector<8x32xf32>
    tpu.vector_store %arg13[%c0_27, %c0_28], %86 {strides = array<i32>} : memref<16x32xf32, #tpu.memory_space<vmem>>, vector<8x32xf32>,
    %c8 = arith.constant 8 : index
    %c0_29 = arith.constant 0 : index
    %88 = vector.load %arg12[%c8, %c0_29] : memref<16x128xf32, #tpu.memory_space<vmem>>, vector<2x128xf32>
    %cst_30 = arith.constant dense<0.000000e+00> : vector<2x128xf32>
    %89 = tpu.matmul %85, %13, %cst_30 {dimension_numbers = #tpu.dot_dimension_numbers<[1], [0], [0], [1], [0, 0, 1, 1], [], []>} : vector<2x32xf32>, vector<32x128xf32>, vector<2x128xf32> -> vector<2x128xf32>
    %90 = arith.addf %88, %89 : vector<2x128xf32>
    %91 = arith.negf %90 : vector<2x128xf32>
    %92 = math.exp %91 : vector<2x128xf32>
    %cst_31 = arith.constant 1.000000e+00 : f32
    %93 = vector.broadcast %cst_31 : f32 to vector<2x128xf32>
    %94 = arith.addf %93, %92 : vector<2x128xf32>
    %95 = arith.divf %93, %94 : vector<2x128xf32>
    %96 = math.tanh %90 : vector<2x128xf32>
    %97 = vector.extract_strided_slice %95 {offsets = [0, 0], sizes = [2, 32], strides = [1, 1]} : vector<2x128xf32> to vector<2x32xf32>
    %98 = vector.extract_strided_slice %95 {offsets = [0, 32], sizes = [2, 32], strides = [1, 1]} : vector<2x128xf32> to vector<2x32xf32>
    %99 = vector.extract_strided_slice %96 {offsets = [0, 64], sizes = [2, 32], strides = [1, 1]} : vector<2x128xf32> to vector<2x32xf32>
    %100 = vector.extract_strided_slice %95 {offsets = [0, 96], sizes = [2, 32], strides = [1, 1]} : vector<2x128xf32> to vector<2x32xf32>
    %101 = arith.mulf %98, %83 : vector<2x32xf32>
    %102 = arith.mulf %97, %99 : vector<2x32xf32>
    %103 = arith.addf %101, %102 : vector<2x32xf32>
    %104 = math.tanh %103 : vector<2x32xf32>
    %105 = arith.mulf %100, %104 : vector<2x32xf32>
    %c10 = arith.constant 10 : index
    %c0_32 = arith.constant 0 : index
    %106 = vector.load %arg12[%c10, %c0_32] : memref<16x128xf32, #tpu.memory_space<vmem>>, vector<2x128xf32>
    %cst_33 = arith.constant dense<0.000000e+00> : vector<2x128xf32>
    %107 = tpu.matmul %105, %13, %cst_33 {dimension_numbers = #tpu.dot_dimension_numbers<[1], [0], [0], [1], [0, 0, 1, 1], [], []>} : vector<2x32xf32>, vector<32x128xf32>, vector<2x128xf32> -> vector<2x128xf32>
    %108 = arith.addf %106, %107 : vector<2x128xf32>
    %109 = arith.negf %108 : vector<2x128xf32>
    %110 = math.exp %109 : vector<2x128xf32>
    %cst_34 = arith.constant 1.000000e+00 : f32
    %111 = vector.broadcast %cst_34 : f32 to vector<2x128xf32>
    %112 = arith.addf %111, %110 : vector<2x128xf32>
    %113 = arith.divf %111, %112 : vector<2x128xf32>
    %114 = math.tanh %108 : vector<2x128xf32>
    %115 = vector.extract_strided_slice %113 {offsets = [0, 0], sizes = [2, 32], strides = [1, 1]} : vector<2x128xf32> to vector<2x32xf32>
    %116 = vector.extract_strided_slice %113 {offsets = [0, 32], sizes = [2, 32], strides = [1, 1]} : vector<2x128xf32> to vector<2x32xf32>
    %117 = vector.extract_strided_slice %114 {offsets = [0, 64], sizes = [2, 32], strides = [1, 1]} : vector<2x128xf32> to vector<2x32xf32>
    %118 = vector.extract_strided_slice %113 {offsets = [0, 96], sizes = [2, 32], strides = [1, 1]} : vector<2x128xf32> to vector<2x32xf32>
    %119 = arith.mulf %116, %103 : vector<2x32xf32>
    %120 = arith.mulf %115, %117 : vector<2x32xf32>
    %121 = arith.addf %119, %120 : vector<2x32xf32>
    %122 = math.tanh %121 : vector<2x32xf32>
    %123 = arith.mulf %118, %122 : vector<2x32xf32>
    %c12 = arith.constant 12 : index
    %c0_35 = arith.constant 0 : index
    %124 = vector.load %arg12[%c12, %c0_35] : memref<16x128xf32, #tpu.memory_space<vmem>>, vector<2x128xf32>
    %cst_36 = arith.constant dense<0.000000e+00> : vector<2x128xf32>
    %125 = tpu.matmul %123, %13, %cst_36 {dimension_numbers = #tpu.dot_dimension_numbers<[1], [0], [0], [1], [0, 0, 1, 1], [], []>} : vector<2x32xf32>, vector<32x128xf32>, vector<2x128xf32> -> vector<2x128xf32>
    %126 = arith.addf %124, %125 : vector<2x128xf32>
    %127 = arith.negf %126 : vector<2x128xf32>
    %128 = math.exp %127 : vector<2x128xf32>
    %cst_37 = arith.constant 1.000000e+00 : f32
    %129 = vector.broadcast %cst_37 : f32 to vector<2x128xf32>
    %130 = arith.addf %129, %128 : vector<2x128xf32>
    %131 = arith.divf %129, %130 : vector<2x128xf32>
    %132 = math.tanh %126 : vector<2x128xf32>
    %133 = vector.extract_strided_slice %131 {offsets = [0, 0], sizes = [2, 32], strides = [1, 1]} : vector<2x128xf32> to vector<2x32xf32>
    %134 = vector.extract_strided_slice %131 {offsets = [0, 32], sizes = [2, 32], strides = [1, 1]} : vector<2x128xf32> to vector<2x32xf32>
    %135 = vector.extract_strided_slice %132 {offsets = [0, 64], sizes = [2, 32], strides = [1, 1]} : vector<2x128xf32> to vector<2x32xf32>
    %136 = vector.extract_strided_slice %131 {offsets = [0, 96], sizes = [2, 32], strides = [1, 1]} : vector<2x128xf32> to vector<2x32xf32>
    %137 = arith.mulf %134, %121 : vector<2x32xf32>
    %138 = arith.mulf %133, %135 : vector<2x32xf32>
    %139 = arith.addf %137, %138 : vector<2x32xf32>
    %140 = math.tanh %139 : vector<2x32xf32>
    %141 = arith.mulf %136, %140 : vector<2x32xf32>
    %c14 = arith.constant 14 : index
    %c0_38 = arith.constant 0 : index
    %142 = vector.load %arg12[%c14, %c0_38] : memref<16x128xf32, #tpu.memory_space<vmem>>, vector<2x128xf32>
    %cst_39 = arith.constant dense<0.000000e+00> : vector<2x128xf32>
    %143 = tpu.matmul %141, %13, %cst_39 {dimension_numbers = #tpu.dot_dimension_numbers<[1], [0], [0], [1], [0, 0, 1, 1], [], []>} : vector<2x32xf32>, vector<32x128xf32>, vector<2x128xf32> -> vector<2x128xf32>
    %144 = arith.addf %142, %143 : vector<2x128xf32>
    %145 = arith.negf %144 : vector<2x128xf32>
    %146 = math.exp %145 : vector<2x128xf32>
    %cst_40 = arith.constant 1.000000e+00 : f32
    %147 = vector.broadcast %cst_40 : f32 to vector<2x128xf32>
    %148 = arith.addf %147, %146 : vector<2x128xf32>
    %149 = arith.divf %147, %148 : vector<2x128xf32>
    %150 = math.tanh %144 : vector<2x128xf32>
    %151 = vector.extract_strided_slice %149 {offsets = [0, 0], sizes = [2, 32], strides = [1, 1]} : vector<2x128xf32> to vector<2x32xf32>
    %152 = vector.extract_strided_slice %149 {offsets = [0, 32], sizes = [2, 32], strides = [1, 1]} : vector<2x128xf32> to vector<2x32xf32>
    %153 = vector.extract_strided_slice %150 {offsets = [0, 64], sizes = [2, 32], strides = [1, 1]} : vector<2x128xf32> to vector<2x32xf32>
    %154 = vector.extract_strided_slice %149 {offsets = [0, 96], sizes = [2, 32], strides = [1, 1]} : vector<2x128xf32> to vector<2x32xf32>
    %155 = arith.mulf %152, %139 : vector<2x32xf32>
    %156 = arith.mulf %151, %153 : vector<2x32xf32>
    %157 = arith.addf %155, %156 : vector<2x32xf32>
    %158 = math.tanh %157 : vector<2x32xf32>
    %159 = arith.mulf %154, %158 : vector<2x32xf32>
    %160 = tpu.concatenate %105, %123, %141, %159 in 0 : vector<2x32xf32>, vector<2x32xf32>, vector<2x32xf32>, vector<2x32xf32> -> vector<8x32xf32>
    %c8_41 = arith.constant 8 : index
    %c0_42 = arith.constant 0 : index
    %161 = vector.load %arg13[%c8_41, %c0_42] : memref<16x32xf32, #tpu.memory_space<vmem>>, vector<8x32xf32>
    tpu.vector_store %arg13[%c8_41, %c0_42], %160 {strides = array<i32>} : memref<16x32xf32, #tpu.memory_space<vmem>>, vector<8x32xf32>,
    %c0_43 = arith.constant 0 : index
    %c0_44 = arith.constant 0 : index
    %162 = vector.load %arg10[%c0_43, %c0_44] : memref<2x32xf32, #tpu.memory_space<vmem>>, vector<2x32xf32>
    tpu.vector_store %arg10[%c0_43, %c0_44], %159 {strides = array<i32>} : memref<2x32xf32, #tpu.memory_space<vmem>>, vector<2x32xf32>,
    %c0_45 = arith.constant 0 : index
    %c0_46 = arith.constant 0 : index
    %163 = vector.load %arg11[%c0_45, %c0_46] : memref<2x32xf32, #tpu.memory_space<vmem>>, vector<2x32xf32>
    tpu.vector_store %arg11[%c0_45, %c0_46], %157 {strides = array<i32>} : memref<2x32xf32, #tpu.memory_space<vmem>>, vector<2x32xf32>,
    %c0_47 = arith.constant 0 : index
    %c0_48 = arith.constant 0 : index
    %164 = vector.load %arg13[%c0_47, %c0_48] : memref<16x32xf32, #tpu.memory_space<vmem>>, vector<16x32xf32>
    %c0_49 = arith.constant 0 : index
    %c0_50 = arith.constant 0 : index
    %165 = vector.load %arg7[%c0_49, %c0_50] : memref<32x16xf32, #tpu.memory_space<vmem>>, vector<32x16xf32>
    %cst_51 = arith.constant dense<0.000000e+00> : vector<16x16xf32>
    %166 = tpu.matmul %164, %165, %cst_51 {dimension_numbers = #tpu.dot_dimension_numbers<[1], [0], [0], [1], [0, 0, 1, 1], [], []>} : vector<16x32xf32>, vector<32x16xf32>, vector<16x16xf32> -> vector<16x16xf32>
    %c0_52 = arith.constant 0 : index
    %c0_53 = arith.constant 0 : index
    %167 = vector.load %arg8[%c0_52, %c0_53] : memref<1x16xf32, #tpu.memory_space<vmem>>, vector<1x16xf32>
    %168 = vector.broadcast %167 : vector<1x16xf32> to vector<16x16xf32>
    %169 = arith.addf %166, %168 : vector<16x16xf32>
    %cst_54 = arith.constant dense<0xFF800000> : vector<16xf32>
    %170 = vector.multi_reduction <maximumf>, %169, %cst_54 [1] : vector<16x16xf32> to vector<16xf32>
    %171 = vector.shape_cast %170 : vector<16xf32> to vector<16x1xf32>
    %172 = vector.broadcast %171 : vector<16x1xf32> to vector<16x16xf32>
    %173 = arith.subf %169, %172 : vector<16x16xf32>
    %174 = math.exp %173 : vector<16x16xf32>
    %cst_55 = arith.constant dense<0.000000e+00> : vector<16xf32>
    %175 = vector.multi_reduction <add>, %174, %cst_55 [1] : vector<16x16xf32> to vector<16xf32>
    %176 = vector.shape_cast %175 : vector<16xf32> to vector<16x1xf32>
    %177 = math.log %176 : vector<16x1xf32>
    %178 = vector.broadcast %177 : vector<16x1xf32> to vector<16x16xf32>
    %179 = arith.subf %173, %178 : vector<16x16xf32>
    %c0_56 = arith.constant 0 : index
    %c0_57 = arith.constant 0 : index
    %180 = vector.load %arg9[%c0_56, %c0_57] : memref<16x16xf32, #tpu.memory_space<vmem>>, vector<16x16xf32>
    tpu.vector_store %arg9[%c0_56, %c0_57], %179 {strides = array<i32>} : memref<16x16xf32, #tpu.memory_space<vmem>>, vector<16x16xf32>,
    return
  }
  func.func @transform_0(%arg0: i32) -> (i32, i32) {
    %c0_i32 = arith.constant 0 : i32
    %c0_i32_0 = arith.constant 0 : i32
    %c0_i32_1 = arith.constant 0 : i32
    return %c0_i32, %c0_i32_0 : i32, i32
  }
  func.func @transform_1(%arg0: i32) -> (i32, i32) {
    %c0_i32 = arith.constant 0 : i32
    %c0_i32_0 = arith.constant 0 : i32
    %c0_i32_1 = arith.constant 0 : i32
    return %c0_i32, %c0_i32_0 : i32, i32
  }
  func.func @transform_2(%arg0: i32) -> (i32, i32) {
    %c0_i32 = arith.constant 0 : i32
    %c0_i32_0 = arith.constant 0 : i32
    %c0_i32_1 = arith.constant 0 : i32
    return %c0_i32, %c0_i32_0 : i32, i32
  }
  func.func @transform_3(%arg0: i32) -> (i32, i32) {
    %c0_i32 = arith.constant 0 : i32
    %c0_i32_0 = arith.constant 0 : i32
    %c0_i32_1 = arith.constant 0 : i32
    return %c0_i32, %c0_i32_0 : i32, i32
  }
  func.func @transform_4(%arg0: i32) -> (i32, i32) {
    %c0_i32 = arith.constant 0 : i32
    %c0_i32_0 = arith.constant 0 : i32
    %c0_i32_1 = arith.constant 0 : i32
    return %c0_i32, %c0_i32_0 : i32, i32
  }
  func.func @transform_5(%arg0: i32) -> (i32, i32) {
    %c0_i32 = arith.constant 0 : i32
    %c0_i32_0 = arith.constant 0 : i32
    %c0_i32_1 = arith.constant 0 : i32
    return %c0_i32, %c0_i32_0 : i32, i32
  }
  func.func @transform_6(%arg0: i32) -> (i32, i32) {
    %c0_i32 = arith.constant 0 : i32
    %c0_i32_0 = arith.constant 0 : i32
    %c0_i32_1 = arith.constant 0 : i32
    return %c0_i32, %c0_i32_0 : i32, i32
  }
  func.func @transform_7(%arg0: i32) -> (i32, i32) {
    %c0_i32 = arith.constant 0 : i32
    %c0_i32_0 = arith.constant 0 : i32
    %c0_i32_1 = arith.constant 0 : i32
    return %c0_i32, %c0_i32_0 : i32, i32
  }
  func.func @transform_8(%arg0: i32) -> (i32, i32) {
    %c0_i32 = arith.constant 0 : i32
    %c0_i32_0 = arith.constant 0 : i32
    %c0_i32_1 = arith.constant 0 : i32
    return %c0_i32, %c0_i32_0 : i32, i32
  }
  func.func @transform_9(%arg0: i32) -> (i32, i32) {
    %c0_i32 = arith.constant 0 : i32
    %c0_i32_0 = arith.constant 0 : i32
    %c0_i32_1 = arith.constant 0 : i32
    return %c0_i32, %c0_i32_0 : i32, i32
  }
  func.func @transform_10(%arg0: i32) -> (i32, i32) {
    %c0_i32 = arith.constant 0 : i32
    %c0_i32_0 = arith.constant 0 : i32
    %c0_i32_1 = arith.constant 0 : i32
    return %c0_i32, %c0_i32_0 : i32, i32
  }
}

</mosaic_0001>

<llo_original>
// kernel: tpu_custom_call.1
$region0: #{tpu_custom_call.1}
  #allocation0 [shape = 'u32[]', space=smem, size = 0x4, offset = 0x4, fixed_abs, tag = 'smem constant byte address 0x4 - core index']
  #allocation1 [shape = 'u32[144,128]{1,0:T(1,128)}', space=vmem, size = 0x12000, scoped, tag = 'internal scratch']
  #allocation2 [shape = 'f32[16,128]{1,0:T(8,128)}', space=vmem, size = 0x2000, scoped, tag = 'scratch operand']
  #allocation3 [shape = 'f32[16,32]{1,0:T(8,128)}', space=vmem, size = 0x2000, scoped, tag = 'scratch operand']
  %s0 = inlined_call_operand.vmem [shape: s32[16,1], index: 0, kind: input, shape index: {}]
  %s1 = inlined_call_operand.vmem [shape: f32[16,16], index: 1, kind: input, shape index: {}]
  %s2 = inlined_call_operand.vmem [shape: f32[16,128], index: 2, kind: input, shape index: {}]
  %s3 = inlined_call_operand.vmem [shape: f32[32,128], index: 3, kind: input, shape index: {}]
  %s4 = inlined_call_operand.vmem [shape: f32[2,32], index: 4, kind: input, shape index: {}]
  %s5 = inlined_call_operand.vmem [shape: f32[2,32], index: 5, kind: input, shape index: {}]
  %s6 = inlined_call_operand.vmem [shape: f32[32,16], index: 6, kind: input, shape index: {}]
  %s7 = inlined_call_operand.vmem [shape: f32[1,16], index: 7, kind: input, shape index: {}]
  %s8 = inlined_call_operand.hbm [shape: f32[16,16], index: 8, kind: output, shape index: {0}]
  %s9 = inlined_call_operand.hbm [shape: f32[2,32], index: 9, kind: output, shape index: {1}]
  %s10 = inlined_call_operand.hbm [shape: f32[2,32], index: 10, kind: output, shape index: {2}]
  %11 = xla_tuple %s8, %s9, %s10
  %s12 = sld [smem:[#allocation0]]
  $region58: #{tpu_custom_call.1} parent=0
    _
  %s14 = ssub.s32 1, %s12
  %s15 = scalar_select 0, %s14, %s12
  $region1: #{tpu_custom_call.1} parent=0
    #allocation4 [shape = 'u8[8192]{0}', space=vmem, size = 0x2000, scoped, tag = 'output window, operand 0, single buffered']
    #allocation5 [shape = 's32[1]{0}', space=sflag, size = 0x4, scoped, tag = 'scoped memory for tpu_custom_call.1']
    #allocation6 [shape = 'u8[1024]{0}', space=vmem, size = 0x400, scoped, tag = 'output window, operand 1, single buffered']
    #allocation7 [shape = 's32[1]{0}', space=sflag, size = 0x4, scoped, tag = 'scoped memory for tpu_custom_call.1']
    #allocation8 [shape = 'u8[1024]{0}', space=vmem, size = 0x400, scoped, tag = 'output window, operand 2, single buffered']
    %16 = vsyncpa [#allocation5], 0
    %17 = vsyncpa [#allocation7], 0
    // Predicated region
    $region2: #{tpu_custom_call.1} parent=1 // pred_check
      _
    $region3: #{tpu_custom_call.1} parent=1 // pred_check_branch
      %19 = sbr.rel (0) target = $region5
    $region4: #{tpu_custom_call.1} parent=1 // pred_region
      _
    $region5: #{tpu_custom_call.1} parent=1 // pred_fallthru
      _
    // Predicated region
    $region6: #{tpu_custom_call.1} parent=1 // pred_check
      _
    $region7: #{tpu_custom_call.1} parent=1 // pred_check_branch
      %21 = sbr.rel (0) target = $region9
    $region8: #{tpu_custom_call.1} parent=1 // pred_region
      _
    $region9: #{tpu_custom_call.1} parent=1 // pred_fallthru
      _
    // Predicated region
    $region10: #{tpu_custom_call.1} parent=1 // pred_check
      _
    $region11: #{tpu_custom_call.1} parent=1 // pred_check_branch
      %23 = sbr.rel (0) target = $region13
    $region12: #{tpu_custom_call.1} parent=1 // pred_region
      _
    $region13: #{tpu_custom_call.1} parent=1 // pred_fallthru
      _
    // Predicated region
    $region14: #{tpu_custom_call.1} parent=1 // pred_check
      _
    $region15: #{tpu_custom_call.1} parent=1 // pred_check_branch
      %25 = sbr.rel (0) target = $region17
    $region16: #{tpu_custom_call.1} parent=1 // pred_region
      _
    $region17: #{tpu_custom_call.1} parent=1 // pred_fallthru
      _
    // Predicated region
    $region18: #{tpu_custom_call.1} parent=1 // pred_check
      _
    $region19: #{tpu_custom_call.1} parent=1 // pred_check_branch
      %27 = sbr.rel (0) target = $region21
    $region20: #{tpu_custom_call.1} parent=1 // pred_region
      _
    $region21: #{tpu_custom_call.1} parent=1 // pred_fallthru
      _
    // Predicated region
    $region22: #{tpu_custom_call.1} parent=1 // pred_check
      _
    $region23: #{tpu_custom_call.1} parent=1 // pred_check_branch
      %29 = sbr.rel (0) target = $region25
    $region24: #{tpu_custom_call.1} parent=1 // pred_region
      _
    $region25: #{tpu_custom_call.1} parent=1 // pred_fallthru
      _
    // Predicated region
    $region26: #{tpu_custom_call.1} parent=1 // pred_check
      _
    $region27: #{tpu_custom_call.1} parent=1 // pred_check_branch
      %31 = sbr.rel (0) target = $region29
    $region28: #{tpu_custom_call.1} parent=1 // pred_region
      _
    $region29: #{tpu_custom_call.1} parent=1 // pred_fallthru
      _
    // Predicated region
    $region30: #{tpu_custom_call.1} parent=1 // pred_check
      _
    $region31: #{tpu_custom_call.1} parent=1 // pred_check_branch
      %33 = sbr.rel (0) target = $region33
    $region32: #{tpu_custom_call.1} parent=1 // pred_region
      _
    $region33: #{tpu_custom_call.1} parent=1 // pred_fallthru
      _
    %v34 = vld [vmem:[%s0] sm:$0xff]
    %v35 = vld [vmem:[%s0 + $0x8] sm:$0xff]
    %v36 = vlaneseq
    %v37 = vand.u32 %v36, 127
    %38 = vset.pattern.permute.xlu0 0
    %39 = vperm.xlu0 %38, %v34
    %v40 = vpop.permute.xlu0 %39
    %41 = vset.pattern.permute.xlu0 0
    %42 = vperm.xlu0 %41, %v35
    %v43 = vpop.permute.xlu0 %42
    %vm44 = vcmp.eq.s32.totalorder %v37, %v40
    %vm45 = vcmp.eq.s32.totalorder %v37, %v43
    %v46 = vsel %vm44, 1, 0
    %v47 = vsel %vm45, 1, 0
    %v48 = vcvt.s32.f32 %v46
    %v49 = vcvt.s32.f32 %v47
    %v50 = vld [vmem:[%s1] sm:$0xff]
    %v51 = vld [vmem:[%s1 + $0x8] sm:$0xff]
    %vm52 = vcmask 130048
    %v54 = vsel %vm52, %v48, 0
    %v57 = vsel %vm52, %v49, 0
    %59 = vmatprep.subr.mxu0 0.0
    %60 = vmatpush1.msra.mxu0 0.0
    %61 = vmatprep.subr.mxu0 0.0
    %62 = vmatpush1.msra.mxu0 0.0
    %63 = vmatprep.subr.mxu0 0.0
    %64 = vmatpush1.msra.mxu0 0.0
    %65 = vmatprep.subr.mxu0 0.0
    %66 = vmatpush1.msra.mxu0 0.0
    %67 = vmatprep.subr.mxu0 0.0
    %68 = vmatpush1.msra.mxu0 0.0
    %69 = vmatprep.subr.mxu0 0.0
    %70 = vmatpush1.msra.mxu0 0.0
    %71 = vmatprep.subr.mxu0 0.0
    %72 = vmatpush1.msra.mxu0 0.0
    %73 = vmatprep.subr.mxu0 0.0
    %74 = vmatpush1.msra.mxu0 0.0
    %75 = vmatprep.subr.mxu0 0.0
    %76 = vmatpush1.msra.mxu0 0.0
    %77 = vmatprep.subr.mxu0 0.0
    %78 = vmatpush1.msra.mxu0 0.0
    %79 = vmatprep.subr.mxu0 0.0
    %80 = vmatpush1.msra.mxu0 0.0
    %81 = vmatprep.subr.mxu0 0.0
    %82 = vmatpush1.msra.mxu0 0.0
    %83 = vmatprep.subr.mxu0 0.0
    %84 = vmatpush1.msra.mxu0 0.0
    %85 = vmatprep.subr.mxu0 0.0
    %86 = vmatpush1.msra.mxu0 0.0
    %87 = vmatprep.subr.mxu0 0.0
    %88 = vmatpush1.msra.mxu0 %v51
    %89 = vmatprep.subr.mxu0 0.0
    %90 = vmatpush1.msra.mxu0 %v50
    %91 = vmatprep.subr.mxu0 0.0
    %92 = vmatpush2.msra.mxu0 0.0
    %93 = vmatprep.subr.mxu0 0.0
    %94 = vmatpush2.msra.mxu0 0.0
    %95 = vmatprep.subr.mxu0 0.0
    %96 = vmatpush2.msra.mxu0 0.0
    %97 = vmatprep.subr.mxu0 0.0
    %98 = vmatpush2.msra.mxu0 0.0
    %99 = vmatprep.subr.mxu0 0.0
    %100 = vmatpush2.msra.mxu0 0.0
    %101 = vmatprep.subr.mxu0 0.0
    %102 = vmatpush2.msra.mxu0 0.0
    %103 = vmatprep.subr.mxu0 0.0
    %104 = vmatpush2.msra.mxu0 0.0
    %105 = vmatprep.subr.mxu0 0.0
    %106 = vmatpush2.msra.mxu0 0.0
    %107 = vmatprep.subr.mxu0 0.0
    %108 = vmatpush2.msra.mxu0 0.0
    %109 = vmatprep.subr.mxu0 0.0
    %110 = vmatpush2.msra.mxu0 0.0
    %111 = vmatprep.subr.mxu0 0.0
    %112 = vmatpush2.msra.mxu0 0.0
    %113 = vmatprep.subr.mxu0 0.0
    %114 = vmatpush2.msra.mxu0 0.0
    %115 = vmatprep.subr.mxu0 0.0
    %116 = vmatpush2.msra.mxu0 0.0
    %117 = vmatprep.subr.mxu0 0.0
    %118 = vmatpush2.msra.mxu0 0.0
    %119 = vmatprep.subr.mxu0 0.0
    %120 = vmatpush2.msra.mxu0 0.0
    %121 = vmatprep.subr.mxu0 0.0
    %122 = vmatpush2.msra.mxu0 0.0
    %123 = vmatprep.mubr.f32.mxu0 0.0
    %124 = vmatmul.mubr.f32.gmra.mxu0 %v54
    %v125 = vpop.f32.mrf.mxu0
    %v126 = vadd.f32 0.0, %v125
    %v127 = vpop.f32.mrf.mxu0
    %128 = vmatprep.mubr.f32.mxu0 0.0
    %129 = vmatmul.mubr.f32.gmra.mxu0 %v57
    %v130 = vpop.f32.mrf.mxu0
    %v131 = vadd.f32 0.0, %v130
    %v132 = vpop.f32.mrf.mxu0
    %133 = vdwg.mxu0
    %v134 = vld [vmem:[%s2] sm:$0xff]
    %v135 = vld [vmem:[%s2 + $0x8] sm:$0xff]
    %v137 = vsel %vm52, %v126, 0
    %v140 = vsel %vm52, %v131, 0
    %142 = vmatprep.subr.mxu0 0.0
    %143 = vmatpush1.msra.mxu0 0.0
    %144 = vmatprep.subr.mxu0 0.0
    %145 = vmatpush1.msra.mxu0 0.0
    %146 = vmatprep.subr.mxu0 0.0
    %147 = vmatpush1.msra.mxu0 0.0
    %148 = vmatprep.subr.mxu0 0.0
    %149 = vmatpush1.msra.mxu0 0.0
    %150 = vmatprep.subr.mxu0 0.0
    %151 = vmatpush1.msra.mxu0 0.0
    %152 = vmatprep.subr.mxu0 0.0
    %153 = vmatpush1.msra.mxu0 0.0
    %154 = vmatprep.subr.mxu0 0.0
    %155 = vmatpush1.msra.mxu0 0.0
    %156 = vmatprep.subr.mxu0 0.0
    %157 = vmatpush1.msra.mxu0 0.0
    %158 = vmatprep.subr.mxu0 0.0
    %159 = vmatpush1.msra.mxu0 0.0
    %160 = vmatprep.subr.mxu0 0.0
    %161 = vmatpush1.msra.mxu0 0.0
    %162 = vmatprep.subr.mxu0 0.0
    %163 = vmatpush1.msra.mxu0 0.0
    %164 = vmatprep.subr.mxu0 0.0
    %165 = vmatpush1.msra.mxu0 0.0
    %166 = vmatprep.subr.mxu0 0.0
    %167 = vmatpush1.msra.mxu0 0.0
    %168 = vmatprep.subr.mxu0 0.0
    %169 = vmatpush1.msra.mxu0 0.0
    %170 = vmatprep.subr.mxu0 0.0
    %171 = vmatpush1.msra.mxu0 %v135
    %172 = vmatprep.subr.mxu0 0.0
    %173 = vmatpush1.msra.mxu0 %v134
    %174 = vmatprep.subr.mxu0 0.0
    %175 = vmatpush2.msra.mxu0 0.0
    %176 = vmatprep.subr.mxu0 0.0
    %177 = vmatpush2.msra.mxu0 0.0
    %178 = vmatprep.subr.mxu0 0.0
    %179 = vmatpush2.msra.mxu0 0.0
    %180 = vmatprep.subr.mxu0 0.0
    %181 = vmatpush2.msra.mxu0 0.0
    %182 = vmatprep.subr.mxu0 0.0
    %183 = vmatpush2.msra.mxu0 0.0
    %184 = vmatprep.subr.mxu0 0.0
    %185 = vmatpush2.msra.mxu0 0.0
    %186 = vmatprep.subr.mxu0 0.0
    %187 = vmatpush2.msra.mxu0 0.0
    %188 = vmatprep.subr.mxu0 0.0
    %189 = vmatpush2.msra.mxu0 0.0
    %190 = vmatprep.subr.mxu0 0.0
    %191 = vmatpush2.msra.mxu0 0.0
    %192 = vmatprep.subr.mxu0 0.0
    %193 = vmatpush2.msra.mxu0 0.0
    %194 = vmatprep.subr.mxu0 0.0
    %195 = vmatpush2.msra.mxu0 0.0
    %196 = vmatprep.subr.mxu0 0.0
    %197 = vmatpush2.msra.mxu0 0.0
    %198 = vmatprep.subr.mxu0 0.0
    %199 = vmatpush2.msra.mxu0 0.0
    %200 = vmatprep.subr.mxu0 0.0
    %201 = vmatpush2.msra.mxu0 0.0
    %202 = vmatprep.subr.mxu0 0.0
    %203 = vmatpush2.msra.mxu0 0.0
    %204 = vmatprep.subr.mxu0 0.0
    %205 = vmatpush2.msra.mxu0 0.0
    %206 = vmatprep.mubr.f32.mxu0 0.0
    %207 = vmatmul.mubr.f32.gmra.mxu0 %v137
    %v208 = vpop.f32.mrf.mxu0
    %v209 = vadd.f32 0.0, %v208
    %v210 = vpop.f32.mrf.mxu0
    %211 = vmatprep.mubr.f32.mxu0 0.0
    %212 = vmatmul.mubr.f32.gmra.mxu0 %v140
    %v213 = vpop.f32.mrf.mxu0
    %v214 = vadd.f32 0.0, %v213
    %v215 = vpop.f32.mrf.mxu0
    %216 = vdwg.mxu0
    %217 = vst [vmem:[#allocation2] sm:$0xff] %v209
    %218 = vst [vmem:[#allocation2 + $0x8] sm:$0xff] %v214
    %v219 = vld [vmem:[%s4] sm:$0x3]
    %v220 = vld [vmem:[%s5] sm:$0x3]
    %v221 = vld [vmem:[%s3] sm:$0xff]
    %v222 = vld [vmem:[%s3 + $0x8] sm:$0xff]
    %v223 = vld [vmem:[%s3 + $0x10] sm:$0xff]
    %v224 = vld [vmem:[%s3 + $0x18] sm:$0xff]
    %v225 = vld [vmem:[#allocation2] sm:$0x3]
    %vm226 = vcmask 261120
    %v228 = vsel %vm226, %v219, 0
    %230 = vmatprep.subr.mxu0 0.0
    %231 = vmatpush1.msra.mxu0 0.0
    %232 = vmatprep.subr.mxu0 0.0
    %233 = vmatpush1.msra.mxu0 0.0
    %234 = vmatprep.subr.mxu0 0.0
    %235 = vmatpush1.msra.mxu0 0.0
    %236 = vmatprep.subr.mxu0 0.0
    %237 = vmatpush1.msra.mxu0 0.0
    %238 = vmatprep.subr.mxu0 0.0
    %239 = vmatpush1.msra.mxu0 0.0
    %240 = vmatprep.subr.mxu0 0.0
    %241 = vmatpush1.msra.mxu0 0.0
    %242 = vmatprep.subr.mxu0 0.0
    %243 = vmatpush1.msra.mxu0 0.0
    %244 = vmatprep.subr.mxu0 0.0
    %245 = vmatpush1.msra.mxu0 0.0
    %246 = vmatprep.subr.mxu0 0.0
    %247 = vmatpush1.msra.mxu0 0.0
    %248 = vmatprep.subr.mxu0 0.0
    %249 = vmatpush1.msra.mxu0 0.0
    %250 = vmatprep.subr.mxu0 0.0
    %251 = vmatpush1.msra.mxu0 0.0
    %252 = vmatprep.subr.mxu0 0.0
    %253 = vmatpush1.msra.mxu0 0.0
    %254 = vmatprep.subr.mxu0 0.0
    %255 = vmatpush1.msra.mxu0 %v224
    %256 = vmatprep.subr.mxu0 0.0
    %257 = vmatpush1.msra.mxu0 %v223
    %258 = vmatprep.subr.mxu0 0.0
    %259 = vmatpush1.msra.mxu0 %v222
    %260 = vmatprep.subr.mxu0 0.0
    %261 = vmatpush1.msra.mxu0 %v221
    %262 = vmatprep.subr.mxu0 0.0
    %263 = vmatpush2.msra.mxu0 0.0
    %264 = vmatprep.subr.mxu0 0.0
    %265 = vmatpush2.msra.mxu0 0.0
    %266 = vmatprep.subr.mxu0 0.0
    %267 = vmatpush2.msra.mxu0 0.0
    %268 = vmatprep.subr.mxu0 0.0
    %269 = vmatpush2.msra.mxu0 0.0
    %270 = vmatprep.subr.mxu0 0.0
    %271 = vmatpush2.msra.mxu0 0.0
    %272 = vmatprep.subr.mxu0 0.0
    %273 = vmatpush2.msra.mxu0 0.0
    %274 = vmatprep.subr.mxu0 0.0
    %275 = vmatpush2.msra.mxu0 0.0
    %276 = vmatprep.subr.mxu0 0.0
    %277 = vmatpush2.msra.mxu0 0.0
    %278 = vmatprep.subr.mxu0 0.0
    %279 = vmatpush2.msra.mxu0 0.0
    %280 = vmatprep.subr.mxu0 0.0
    %281 = vmatpush2.msra.mxu0 0.0
    %282 = vmatprep.subr.mxu0 0.0
    %283 = vmatpush2.msra.mxu0 0.0
    %284 = vmatprep.subr.mxu0 0.0
    %285 = vmatpush2.msra.mxu0 0.0
    %286 = vmatprep.subr.mxu0 0.0
    %287 = vmatpush2.msra.mxu0 0.0
    %288 = vmatprep.subr.mxu0 0.0
    %289 = vmatpush2.msra.mxu0 0.0
    %290 = vmatprep.subr.mxu0 0.0
    %291 = vmatpush2.msra.mxu0 0.0
    %292 = vmatprep.subr.mxu0 0.0
    %293 = vmatpush2.msra.mxu0 0.0
    %294 = vmatprep.mubr.f32.mxu0 0.0
    %295 = vmatmul.mubr.f32.gmra.mxu0 %v228
    %v296 = vpop.f32.mrf.mxu0
    %v297 = vadd.f32 0.0, %v296
    %v298 = vpop.f32.mrf.mxu0
    %299 = vdwg.mxu0
    %v300 = vadd.f32 %v225, %v297
    %v301 = vxor.u32 %v300, 2147483648
    %v302 = vmul.f32 %v301, 1.442695
    %v303 = vpow.pop %v302
    %v304 = vadd.f32 %v303, 1.0
    %v305 = vrcp.pop %v304
    %v306 = vmul.f32 1.0, %v305
    %v307 = vtanh.pop %v300
    %309 = vrot.lane.b32.xlu0 %v220, 32
    %v310 = vpop.permute.xlu0 %309
    %v312 = vmul.f32 %v306, %v310
    %314 = vrot.lane.b32.xlu0 %v307, 64
    %v315 = vpop.permute.xlu0 %314
    %v317 = vmul.f32 %v306, %v315
    %319 = vrot.lane.b32.xlu0 %v317, 32
    %v320 = vpop.permute.xlu0 %319
    %v322 = vadd.f32 %v312, %v320
    %v323 = vtanh.pop %v322
    %325 = vrot.lane.b32.xlu0 %v323, 64
    %v326 = vpop.permute.xlu0 %325
    %v328 = vmul.f32 %v306, %v326
    %v329 = vld [vmem:[#allocation2 + $0x2] sm:$0x3]
    %331 = vrot.lane.b32.xlu0 %v328, 32
    %v332 = vpop.permute.xlu0 %331
    %v333 = vsel %vm226, %v332, 0
    %335 = vmatprep.subr.mxu0 0.0
    %336 = vmatpush1.msra.mxu0 0.0
    %337 = vmatprep.subr.mxu0 0.0
    %338 = vmatpush1.msra.mxu0 0.0
    %339 = vmatprep.subr.mxu0 0.0
    %340 = vmatpush1.msra.mxu0 0.0
    %341 = vmatprep.subr.mxu0 0.0
    %342 = vmatpush1.msra.mxu0 0.0
    %343 = vmatprep.subr.mxu0 0.0
    %344 = vmatpush1.msra.mxu0 0.0
    %345 = vmatprep.subr.mxu0 0.0
    %346 = vmatpush1.msra.mxu0 0.0
    %347 = vmatprep.subr.mxu0 0.0
    %348 = vmatpush1.msra.mxu0 0.0
    %349 = vmatprep.subr.mxu0 0.0
    %350 = vmatpush1.msra.mxu0 0.0
    %351 = vmatprep.subr.mxu0 0.0
    %352 = vmatpush1.msra.mxu0 0.0
    %353 = vmatprep.subr.mxu0 0.0
    %354 = vmatpush1.msra.mxu0 0.0
    %355 = vmatprep.subr.mxu0 0.0
    %356 = vmatpush1.msra.mxu0 0.0
    %357 = vmatprep.subr.mxu0 0.0
    %358 = vmatpush1.msra.mxu0 0.0
    %359 = vmatprep.subr.mxu0 0.0
    %360 = vmatpush1.msra.mxu0 %v224
    %361 = vmatprep.subr.mxu0 0.0
    %362 = vmatpush1.msra.mxu0 %v223
    %363 = vmatprep.subr.mxu0 0.0
    %364 = vmatpush1.msra.mxu0 %v222
    %365 = vmatprep.subr.mxu0 0.0
    %366 = vmatpush1.msra.mxu0 %v221
    %367 = vmatprep.subr.mxu0 0.0
    %368 = vmatpush2.msra.mxu0 0.0
    %369 = vmatprep.subr.mxu0 0.0
    %370 = vmatpush2.msra.mxu0 0.0
    %371 = vmatprep.subr.mxu0 0.0
    %372 = vmatpush2.msra.mxu0 0.0
    %373 = vmatprep.subr.mxu0 0.0
    %374 = vmatpush2.msra.mxu0 0.0
    %375 = vmatprep.subr.mxu0 0.0
    %376 = vmatpush2.msra.mxu0 0.0
    %377 = vmatprep.subr.mxu0 0.0
    %378 = vmatpush2.msra.mxu0 0.0
    %379 = vmatprep.subr.mxu0 0.0
    %380 = vmatpush2.msra.mxu0 0.0
    %381 = vmatprep.subr.mxu0 0.0
    %382 = vmatpush2.msra.mxu0 0.0
    %383 = vmatprep.subr.mxu0 0.0
    %384 = vmatpush2.msra.mxu0 0.0
    %385 = vmatprep.subr.mxu0 0.0
    %386 = vmatpush2.msra.mxu0 0.0
    %387 = vmatprep.subr.mxu0 0.0
    %388 = vmatpush2.msra.mxu0 0.0
    %389 = vmatprep.subr.mxu0 0.0
    %390 = vmatpush2.msra.mxu0 0.0
    %391 = vmatprep.subr.mxu0 0.0
    %392 = vmatpush2.msra.mxu0 0.0
    %393 = vmatprep.subr.mxu0 0.0
    %394 = vmatpush2.msra.mxu0 0.0
    %395 = vmatprep.subr.mxu0 0.0
    %396 = vmatpush2.msra.mxu0 0.0
    %397 = vmatprep.subr.mxu0 0.0
    %398 = vmatpush2.msra.mxu0 0.0
    %399 = vmatprep.mubr.f32.mxu0 0.0
    %400 = vmatmul.mubr.f32.gmra.mxu0 %v333
    %v401 = vpop.f32.mrf.mxu0
    %v402 = vadd.f32 0.0, %v401
    %v403 = vpop.f32.mrf.mxu0
    %404 = vdwg.mxu0
    %v405 = vadd.f32 %v329, %v402
    %v406 = vxor.u32 %v405, 2147483648
    %v407 = vmul.f32 %v406, 1.442695
    %v408 = vpow.pop %v407
    %v409 = vadd.f32 %v408, 1.0
    %v410 = vrcp.pop %v409
    %v411 = vmul.f32 1.0, %v410
    %v412 = vtanh.pop %v405
    %v413 = vmul.f32 %v411, %v322
    %415 = vrot.lane.b32.xlu0 %v412, 64
    %v416 = vpop.permute.xlu0 %415
    %v418 = vmul.f32 %v411, %v416
    %420 = vrot.lane.b32.xlu0 %v418, 32
    %v421 = vpop.permute.xlu0 %420
    %v423 = vadd.f32 %v413, %v421
    %v424 = vtanh.pop %v423
    %426 = vrot.lane.b32.xlu0 %v424, 64
    %v427 = vpop.permute.xlu0 %426
    %v429 = vmul.f32 %v411, %v427
    %v430 = vld [vmem:[#allocation2 + $0x4] sm:$0x3]
    %432 = vrot.lane.b32.xlu0 %v429, 32
    %v433 = vpop.permute.xlu0 %432
    %v434 = vsel %vm226, %v433, 0
    %436 = vmatprep.subr.mxu0 0.0
    %437 = vmatpush1.msra.mxu0 0.0
    %438 = vmatprep.subr.mxu0 0.0
    %439 = vmatpush1.msra.mxu0 0.0
    %440 = vmatprep.subr.mxu0 0.0
    %441 = vmatpush1.msra.mxu0 0.0
    %442 = vmatprep.subr.mxu0 0.0
    %443 = vmatpush1.msra.mxu0 0.0
    %444 = vmatprep.subr.mxu0 0.0
    %445 = vmatpush1.msra.mxu0 0.0
    %446 = vmatprep.subr.mxu0 0.0
    %447 = vmatpush1.msra.mxu0 0.0
    %448 = vmatprep.subr.mxu0 0.0
    %449 = vmatpush1.msra.mxu0 0.0
    %450 = vmatprep.subr.mxu0 0.0
    %451 = vmatpush1.msra.mxu0 0.0
    %452 = vmatprep.subr.mxu0 0.0
    %453 = vmatpush1.msra.mxu0 0.0
    %454 = vmatprep.subr.mxu0 0.0
    %455 = vmatpush1.msra.mxu0 0.0
    %456 = vmatprep.subr.mxu0 0.0
    %457 = vmatpush1.msra.mxu0 0.0
    %458 = vmatprep.subr.mxu0 0.0
    %459 = vmatpush1.msra.mxu0 0.0
    %460 = vmatprep.subr.mxu0 0.0
    %461 = vmatpush1.msra.mxu0 %v224
    %462 = vmatprep.subr.mxu0 0.0
    %463 = vmatpush1.msra.mxu0 %v223
    %464 = vmatprep.subr.mxu0 0.0
    %465 = vmatpush1.msra.mxu0 %v222
    %466 = vmatprep.subr.mxu0 0.0
    %467 = vmatpush1.msra.mxu0 %v221
    %468 = vmatprep.subr.mxu0 0.0
    %469 = vmatpush2.msra.mxu0 0.0
    %470 = vmatprep.subr.mxu0 0.0
    %471 = vmatpush2.msra.mxu0 0.0
    %472 = vmatprep.subr.mxu0 0.0
    %473 = vmatpush2.msra.mxu0 0.0
    %474 = vmatprep.subr.mxu0 0.0
    %475 = vmatpush2.msra.mxu0 0.0
    %476 = vmatprep.subr.mxu0 0.0
    %477 = vmatpush2.msra.mxu0 0.0
    %478 = vmatprep.subr.mxu0 0.0
    %479 = vmatpush2.msra.mxu0 0.0
    %480 = vmatprep.subr.mxu0 0.0
    %481 = vmatpush2.msra.mxu0 0.0
    %482 = vmatprep.subr.mxu0 0.0
    %483 = vmatpush2.msra.mxu0 0.0
    %484 = vmatprep.subr.mxu0 0.0
    %485 = vmatpush2.msra.mxu0 0.0
    %486 = vmatprep.subr.mxu0 0.0
    %487 = vmatpush2.msra.mxu0 0.0
    %488 = vmatprep.subr.mxu0 0.0
    %489 = vmatpush2.msra.mxu0 0.0
    %490 = vmatprep.subr.mxu0 0.0
    %491 = vmatpush2.msra.mxu0 0.0
    %492 = vmatprep.subr.mxu0 0.0
    %493 = vmatpush2.msra.mxu0 0.0
    %494 = vmatprep.subr.mxu0 0.0
    %495 = vmatpush2.msra.mxu0 0.0
    %496 = vmatprep.subr.mxu0 0.0
    %497 = vmatpush2.msra.mxu0 0.0
    %498 = vmatprep.subr.mxu0 0.0
    %499 = vmatpush2.msra.mxu0 0.0
    %500 = vmatprep.mubr.f32.mxu0 0.0
    %501 = vmatmul.mubr.f32.gmra.mxu0 %v434
    %v502 = vpop.f32.mrf.mxu0
    %v503 = vadd.f32 0.0, %v502
    %v504 = vpop.f32.mrf.mxu0
    %505 = vdwg.mxu0
    %v506 = vadd.f32 %v430, %v503
    %v507 = vxor.u32 %v506, 2147483648
    %v508 = vmul.f32 %v507, 1.442695
    %v509 = vpow.pop %v508
    %v510 = vadd.f32 %v509, 1.0
    %v511 = vrcp.pop %v510
    %v512 = vmul.f32 1.0, %v511
    %v513 = vtanh.pop %v506
    %v514 = vmul.f32 %v512, %v423
    %516 = vrot.lane.b32.xlu0 %v513, 64
    %v517 = vpop.permute.xlu0 %516
    %v519 = vmul.f32 %v512, %v517
    %521 = vrot.lane.b32.xlu0 %v519, 32
    %v522 = vpop.permute.xlu0 %521
    %v524 = vadd.f32 %v514, %v522
    %v525 = vtanh.pop %v524
    %527 = vrot.lane.b32.xlu0 %v525, 64
    %v528 = vpop.permute.xlu0 %527
    %v530 = vmul.f32 %v512, %v528
    %v531 = vld [vmem:[#allocation2 + $0x6] sm:$0x3]
    %533 = vrot.lane.b32.xlu0 %v530, 32
    %v534 = vpop.permute.xlu0 %533
    %v535 = vsel %vm226, %v534, 0
    %537 = vmatprep.subr.mxu0 0.0
    %538 = vmatpush1.msra.mxu0 0.0
    %539 = vmatprep.subr.mxu0 0.0
    %540 = vmatpush1.msra.mxu0 0.0
    %541 = vmatprep.subr.mxu0 0.0
    %542 = vmatpush1.msra.mxu0 0.0
    %543 = vmatprep.subr.mxu0 0.0
    %544 = vmatpush1.msra.mxu0 0.0
    %545 = vmatprep.subr.mxu0 0.0
    %546 = vmatpush1.msra.mxu0 0.0
    %547 = vmatprep.subr.mxu0 0.0
    %548 = vmatpush1.msra.mxu0 0.0
    %549 = vmatprep.subr.mxu0 0.0
    %550 = vmatpush1.msra.mxu0 0.0
    %551 = vmatprep.subr.mxu0 0.0
    %552 = vmatpush1.msra.mxu0 0.0
    %553 = vmatprep.subr.mxu0 0.0
    %554 = vmatpush1.msra.mxu0 0.0
    %555 = vmatprep.subr.mxu0 0.0
    %556 = vmatpush1.msra.mxu0 0.0
    %557 = vmatprep.subr.mxu0 0.0
    %558 = vmatpush1.msra.mxu0 0.0
    %559 = vmatprep.subr.mxu0 0.0
    %560 = vmatpush1.msra.mxu0 0.0
    %561 = vmatprep.subr.mxu0 0.0
    %562 = vmatpush1.msra.mxu0 %v224
    %563 = vmatprep.subr.mxu0 0.0
    %564 = vmatpush1.msra.mxu0 %v223
    %565 = vmatprep.subr.mxu0 0.0
    %566 = vmatpush1.msra.mxu0 %v222
    %567 = vmatprep.subr.mxu0 0.0
    %568 = vmatpush1.msra.mxu0 %v221
    %569 = vmatprep.subr.mxu0 0.0
    %570 = vmatpush2.msra.mxu0 0.0
    %571 = vmatprep.subr.mxu0 0.0
    %572 = vmatpush2.msra.mxu0 0.0
    %573 = vmatprep.subr.mxu0 0.0
    %574 = vmatpush2.msra.mxu0 0.0
    %575 = vmatprep.subr.mxu0 0.0
    %576 = vmatpush2.msra.mxu0 0.0
    %577 = vmatprep.subr.mxu0 0.0
    %578 = vmatpush2.msra.mxu0 0.0
    %579 = vmatprep.subr.mxu0 0.0
    %580 = vmatpush2.msra.mxu0 0.0
    %581 = vmatprep.subr.mxu0 0.0
    %582 = vmatpush2.msra.mxu0 0.0
    %583 = vmatprep.subr.mxu0 0.0
    %584 = vmatpush2.msra.mxu0 0.0
    %585 = vmatprep.subr.mxu0 0.0
    %586 = vmatpush2.msra.mxu0 0.0
    %587 = vmatprep.subr.mxu0 0.0
    %588 = vmatpush2.msra.mxu0 0.0
    %589 = vmatprep.subr.mxu0 0.0
    %590 = vmatpush2.msra.mxu0 0.0
    %591 = vmatprep.subr.mxu0 0.0
    %592 = vmatpush2.msra.mxu0 0.0
    %593 = vmatprep.subr.mxu0 0.0
    %594 = vmatpush2.msra.mxu0 0.0
    %595 = vmatprep.subr.mxu0 0.0
    %596 = vmatpush2.msra.mxu0 0.0
    %597 = vmatprep.subr.mxu0 0.0
    %598 = vmatpush2.msra.mxu0 0.0
    %599 = vmatprep.subr.mxu0 0.0
    %600 = vmatpush2.msra.mxu0 0.0
    %601 = vmatprep.mubr.f32.mxu0 0.0
    %602 = vmatmul.mubr.f32.gmra.mxu0 %v535
    %v603 = vpop.f32.mrf.mxu0
    %v604 = vadd.f32 0.0, %v603
    %v605 = vpop.f32.mrf.mxu0
    %606 = vdwg.mxu0
    %v607 = vadd.f32 %v531, %v604
    %v608 = vxor.u32 %v607, 2147483648
    %v609 = vmul.f32 %v608, 1.442695
    %v610 = vpow.pop %v609
    %v611 = vadd.f32 %v610, 1.0
    %v612 = vrcp.pop %v611
    %v613 = vmul.f32 1.0, %v612
    %v614 = vtanh.pop %v607
    %v615 = vmul.f32 %v613, %v524
    %617 = vrot.lane.b32.xlu0 %v614, 64
    %v618 = vpop.permute.xlu0 %617
    %v620 = vmul.f32 %v613, %v618
    %622 = vrot.lane.b32.xlu0 %v620, 32
    %v623 = vpop.permute.xlu0 %622
    %v625 = vadd.f32 %v615, %v623
    %v626 = vtanh.pop %v625
    %628 = vrot.lane.b32.xlu0 %v626, 64
    %v629 = vpop.permute.xlu0 %628
    %v631 = vmul.f32 %v613, %v629
    %v632 = vrot.slane %v429, 6
    %v634 = vrot.slane %v530, 4
    %v637 = vrot.slane %v631, 2
    %vm639 = vcmask 1041408
    %v640 = vsel %vm639, %v328, %v632
    %vm641 = vcmask 1043456
    %v642 = vsel %vm641, %v640, %v634
    %vm643 = vcmask 1045504
    %v644 = vsel %vm643, %v642, %v637
    %646 = vrot.lane.b32.xlu0 %v644, 32
    %v647 = vpop.permute.xlu0 %646
    %649 = vst.msk [vmem:[#allocation3] sm:$0xff] %vm226, %v647
    %v650 = vld [vmem:[#allocation2 + $0x8] sm:$0x3]
    %651 = vrot.lane.b32.xlu0 %v631, 32
    %v652 = vpop.permute.xlu0 %651
    %v653 = vsel %vm226, %v652, 0
    %655 = vmatprep.subr.mxu0 0.0
    %656 = vmatpush1.msra.mxu0 0.0
    %657 = vmatprep.subr.mxu0 0.0
    %658 = vmatpush1.msra.mxu0 0.0
    %659 = vmatprep.subr.mxu0 0.0
    %660 = vmatpush1.msra.mxu0 0.0
    %661 = vmatprep.subr.mxu0 0.0
    %662 = vmatpush1.msra.mxu0 0.0
    %663 = vmatprep.subr.mxu0 0.0
    %664 = vmatpush1.msra.mxu0 0.0
    %665 = vmatprep.subr.mxu0 0.0
    %666 = vmatpush1.msra.mxu0 0.0
    %667 = vmatprep.subr.mxu0 0.0
    %668 = vmatpush1.msra.mxu0 0.0
    %669 = vmatprep.subr.mxu0 0.0
    %670 = vmatpush1.msra.mxu0 0.0
    %671 = vmatprep.subr.mxu0 0.0
    %672 = vmatpush1.msra.mxu0 0.0
    %673 = vmatprep.subr.mxu0 0.0
    %674 = vmatpush1.msra.mxu0 0.0
    %675 = vmatprep.subr.mxu0 0.0
    %676 = vmatpush1.msra.mxu0 0.0
    %677 = vmatprep.subr.mxu0 0.0
    %678 = vmatpush1.msra.mxu0 0.0
    %679 = vmatprep.subr.mxu0 0.0
    %680 = vmatpush1.msra.mxu0 %v224
    %681 = vmatprep.subr.mxu0 0.0
    %682 = vmatpush1.msra.mxu0 %v223
    %683 = vmatprep.subr.mxu0 0.0
    %684 = vmatpush1.msra.mxu0 %v222
    %685 = vmatprep.subr.mxu0 0.0
    %686 = vmatpush1.msra.mxu0 %v221
    %687 = vmatprep.subr.mxu0 0.0
    %688 = vmatpush2.msra.mxu0 0.0
    %689 = vmatprep.subr.mxu0 0.0
    %690 = vmatpush2.msra.mxu0 0.0
    %691 = vmatprep.subr.mxu0 0.0
    %692 = vmatpush2.msra.mxu0 0.0
    %693 = vmatprep.subr.mxu0 0.0
    %694 = vmatpush2.msra.mxu0 0.0
    %695 = vmatprep.subr.mxu0 0.0
    %696 = vmatpush2.msra.mxu0 0.0
    %697 = vmatprep.subr.mxu0 0.0
    %698 = vmatpush2.msra.mxu0 0.0
    %699 = vmatprep.subr.mxu0 0.0
    %700 = vmatpush2.msra.mxu0 0.0
    %701 = vmatprep.subr.mxu0 0.0
    %702 = vmatpush2.msra.mxu0 0.0
    %703 = vmatprep.subr.mxu0 0.0
    %704 = vmatpush2.msra.mxu0 0.0
    %705 = vmatprep.subr.mxu0 0.0
    %706 = vmatpush2.msra.mxu0 0.0
    %707 = vmatprep.subr.mxu0 0.0
    %708 = vmatpush2.msra.mxu0 0.0
    %709 = vmatprep.subr.mxu0 0.0
    %710 = vmatpush2.msra.mxu0 0.0
    %711 = vmatprep.subr.mxu0 0.0
    %712 = vmatpush2.msra.mxu0 0.0
    %713 = vmatprep.subr.mxu0 0.0
    %714 = vmatpush2.msra.mxu0 0.0
    %715 = vmatprep.subr.mxu0 0.0
    %716 = vmatpush2.msra.mxu0 0.0
    %717 = vmatprep.subr.mxu0 0.0
    %718 = vmatpush2.msra.mxu0 0.0
    %719 = vmatprep.mubr.f32.mxu0 0.0
    %720 = vmatmul.mubr.f32.gmra.mxu0 %v653
    %v721 = vpop.f32.mrf.mxu0
    %v722 = vadd.f32 0.0, %v721
    %v723 = vpop.f32.mrf.mxu0
    %724 = vdwg.mxu0
    %v725 = vadd.f32 %v650, %v722
    %v726 = vxor.u32 %v725, 2147483648
    %v727 = vmul.f32 %v726, 1.442695
    %v728 = vpow.pop %v727
    %v729 = vadd.f32 %v728, 1.0
    %v730 = vrcp.pop %v729
    %v731 = vmul.f32 1.0, %v730
    %v732 = vtanh.pop %v725
    %v733 = vmul.f32 %v731, %v625
    %735 = vrot.lane.b32.xlu0 %v732, 64
    %v736 = vpop.permute.xlu0 %735
    %v738 = vmul.f32 %v731, %v736
    %740 = vrot.lane.b32.xlu0 %v738, 32
    %v741 = vpop.permute.xlu0 %740
    %v743 = vadd.f32 %v733, %v741
    %v744 = vtanh.pop %v743
    %746 = vrot.lane.b32.xlu0 %v744, 64
    %v747 = vpop.permute.xlu0 %746
    %v749 = vmul.f32 %v731, %v747
    %v750 = vld [vmem:[#allocation2 + $0xa] sm:$0x3]
    %752 = vrot.lane.b32.xlu0 %v749, 32
    %v753 = vpop.permute.xlu0 %752
    %v754 = vsel %vm226, %v753, 0
    %756 = vmatprep.subr.mxu0 0.0
    %757 = vmatpush1.msra.mxu0 0.0
    %758 = vmatprep.subr.mxu0 0.0
    %759 = vmatpush1.msra.mxu0 0.0
    %760 = vmatprep.subr.mxu0 0.0
    %761 = vmatpush1.msra.mxu0 0.0
    %762 = vmatprep.subr.mxu0 0.0
    %763 = vmatpush1.msra.mxu0 0.0
    %764 = vmatprep.subr.mxu0 0.0
    %765 = vmatpush1.msra.mxu0 0.0
    %766 = vmatprep.subr.mxu0 0.0
    %767 = vmatpush1.msra.mxu0 0.0
    %768 = vmatprep.subr.mxu0 0.0
    %769 = vmatpush1.msra.mxu0 0.0
    %770 = vmatprep.subr.mxu0 0.0
    %771 = vmatpush1.msra.mxu0 0.0
    %772 = vmatprep.subr.mxu0 0.0
    %773 = vmatpush1.msra.mxu0 0.0
    %774 = vmatprep.subr.mxu0 0.0
    %775 = vmatpush1.msra.mxu0 0.0
    %776 = vmatprep.subr.mxu0 0.0
    %777 = vmatpush1.msra.mxu0 0.0
    %778 = vmatprep.subr.mxu0 0.0
    %779 = vmatpush1.msra.mxu0 0.0
    %780 = vmatprep.subr.mxu0 0.0
    %781 = vmatpush1.msra.mxu0 %v224
    %782 = vmatprep.subr.mxu0 0.0
    %783 = vmatpush1.msra.mxu0 %v223
    %784 = vmatprep.subr.mxu0 0.0
    %785 = vmatpush1.msra.mxu0 %v222
    %786 = vmatprep.subr.mxu0 0.0
    %787 = vmatpush1.msra.mxu0 %v221
    %788 = vmatprep.subr.mxu0 0.0
    %789 = vmatpush2.msra.mxu0 0.0
    %790 = vmatprep.subr.mxu0 0.0
    %791 = vmatpush2.msra.mxu0 0.0
    %792 = vmatprep.subr.mxu0 0.0
    %793 = vmatpush2.msra.mxu0 0.0
    %794 = vmatprep.subr.mxu0 0.0
    %795 = vmatpush2.msra.mxu0 0.0
    %796 = vmatprep.subr.mxu0 0.0
    %797 = vmatpush2.msra.mxu0 0.0
    %798 = vmatprep.subr.mxu0 0.0
    %799 = vmatpush2.msra.mxu0 0.0
    %800 = vmatprep.subr.mxu0 0.0
    %801 = vmatpush2.msra.mxu0 0.0
    %802 = vmatprep.subr.mxu0 0.0
    %803 = vmatpush2.msra.mxu0 0.0
    %804 = vmatprep.subr.mxu0 0.0
    %805 = vmatpush2.msra.mxu0 0.0
    %806 = vmatprep.subr.mxu0 0.0
    %807 = vmatpush2.msra.mxu0 0.0
    %808 = vmatprep.subr.mxu0 0.0
    %809 = vmatpush2.msra.mxu0 0.0
    %810 = vmatprep.subr.mxu0 0.0
    %811 = vmatpush2.msra.mxu0 0.0
    %812 = vmatprep.subr.mxu0 0.0
    %813 = vmatpush2.msra.mxu0 0.0
    %814 = vmatprep.subr.mxu0 0.0
    %815 = vmatpush2.msra.mxu0 0.0
    %816 = vmatprep.subr.mxu0 0.0
    %817 = vmatpush2.msra.mxu0 0.0
    %818 = vmatprep.subr.mxu0 0.0
    %819 = vmatpush2.msra.mxu0 0.0
    %820 = vmatprep.mubr.f32.mxu0 0.0
    %821 = vmatmul.mubr.f32.gmra.mxu0 %v754
    %v822 = vpop.f32.mrf.mxu0
    %v823 = vadd.f32 0.0, %v822
    %v824 = vpop.f32.mrf.mxu0
    %825 = vdwg.mxu0
    %v826 = vadd.f32 %v750, %v823
    %v827 = vxor.u32 %v826, 2147483648
    %v828 = vmul.f32 %v827, 1.442695
    %v829 = vpow.pop %v828
    %v830 = vadd.f32 %v829, 1.0
    %v831 = vrcp.pop %v830
    %v832 = vmul.f32 1.0, %v831
    %v833 = vtanh.pop %v826
    %v834 = vmul.f32 %v832, %v743
    %836 = vrot.lane.b32.xlu0 %v833, 64
    %v837 = vpop.permute.xlu0 %836
    %v839 = vmul.f32 %v832, %v837
    %841 = vrot.lane.b32.xlu0 %v839, 32
    %v842 = vpop.permute.xlu0 %841
    %v844 = vadd.f32 %v834, %v842
    %v845 = vtanh.pop %v844
    %847 = vrot.lane.b32.xlu0 %v845, 64
    %v848 = vpop.permute.xlu0 %847
    %v850 = vmul.f32 %v832, %v848
    %v851 = vld [vmem:[#allocation2 + $0xc] sm:$0x3]
    %853 = vrot.lane.b32.xlu0 %v850, 32
    %v854 = vpop.permute.xlu0 %853
    %v855 = vsel %vm226, %v854, 0
    %857 = vmatprep.subr.mxu0 0.0
    %858 = vmatpush1.msra.mxu0 0.0
    %859 = vmatprep.subr.mxu0 0.0
    %860 = vmatpush1.msra.mxu0 0.0
    %861 = vmatprep.subr.mxu0 0.0
    %862 = vmatpush1.msra.mxu0 0.0
    %863 = vmatprep.subr.mxu0 0.0
    %864 = vmatpush1.msra.mxu0 0.0
    %865 = vmatprep.subr.mxu0 0.0
    %866 = vmatpush1.msra.mxu0 0.0
    %867 = vmatprep.subr.mxu0 0.0
    %868 = vmatpush1.msra.mxu0 0.0
    %869 = vmatprep.subr.mxu0 0.0
    %870 = vmatpush1.msra.mxu0 0.0
    %871 = vmatprep.subr.mxu0 0.0
    %872 = vmatpush1.msra.mxu0 0.0
    %873 = vmatprep.subr.mxu0 0.0
    %874 = vmatpush1.msra.mxu0 0.0
    %875 = vmatprep.subr.mxu0 0.0
    %876 = vmatpush1.msra.mxu0 0.0
    %877 = vmatprep.subr.mxu0 0.0
    %878 = vmatpush1.msra.mxu0 0.0
    %879 = vmatprep.subr.mxu0 0.0
    %880 = vmatpush1.msra.mxu0 0.0
    %881 = vmatprep.subr.mxu0 0.0
    %882 = vmatpush1.msra.mxu0 %v224
    %883 = vmatprep.subr.mxu0 0.0
    %884 = vmatpush1.msra.mxu0 %v223
    %885 = vmatprep.subr.mxu0 0.0
    %886 = vmatpush1.msra.mxu0 %v222
    %887 = vmatprep.subr.mxu0 0.0
    %888 = vmatpush1.msra.mxu0 %v221
    %889 = vmatprep.subr.mxu0 0.0
    %890 = vmatpush2.msra.mxu0 0.0
    %891 = vmatprep.subr.mxu0 0.0
    %892 = vmatpush2.msra.mxu0 0.0
    %893 = vmatprep.subr.mxu0 0.0
    %894 = vmatpush2.msra.mxu0 0.0
    %895 = vmatprep.subr.mxu0 0.0
    %896 = vmatpush2.msra.mxu0 0.0
    %897 = vmatprep.subr.mxu0 0.0
    %898 = vmatpush2.msra.mxu0 0.0
    %899 = vmatprep.subr.mxu0 0.0
    %900 = vmatpush2.msra.mxu0 0.0
    %901 = vmatprep.subr.mxu0 0.0
    %902 = vmatpush2.msra.mxu0 0.0
    %903 = vmatprep.subr.mxu0 0.0
    %904 = vmatpush2.msra.mxu0 0.0
    %905 = vmatprep.subr.mxu0 0.0
    %906 = vmatpush2.msra.mxu0 0.0
    %907 = vmatprep.subr.mxu0 0.0
    %908 = vmatpush2.msra.mxu0 0.0
    %909 = vmatprep.subr.mxu0 0.0
    %910 = vmatpush2.msra.mxu0 0.0
    %911 = vmatprep.subr.mxu0 0.0
    %912 = vmatpush2.msra.mxu0 0.0
    %913 = vmatprep.subr.mxu0 0.0
    %914 = vmatpush2.msra.mxu0 0.0
    %915 = vmatprep.subr.mxu0 0.0
    %916 = vmatpush2.msra.mxu0 0.0
    %917 = vmatprep.subr.mxu0 0.0
    %918 = vmatpush2.msra.mxu0 0.0
    %919 = vmatprep.subr.mxu0 0.0
    %920 = vmatpush2.msra.mxu0 0.0
    %921 = vmatprep.mubr.f32.mxu0 0.0
    %922 = vmatmul.mubr.f32.gmra.mxu0 %v855
    %v923 = vpop.f32.mrf.mxu0
    %v924 = vadd.f32 0.0, %v923
    %v925 = vpop.f32.mrf.mxu0
    %926 = vdwg.mxu0
    %v927 = vadd.f32 %v851, %v924
    %v928 = vxor.u32 %v927, 2147483648
    %v929 = vmul.f32 %v928, 1.442695
    %v930 = vpow.pop %v929
    %v931 = vadd.f32 %v930, 1.0
    %v932 = vrcp.pop %v931
    %v933 = vmul.f32 1.0, %v932
    %v934 = vtanh.pop %v927
    %v935 = vmul.f32 %v933, %v844
    %937 = vrot.lane.b32.xlu0 %v934, 64
    %v938 = vpop.permute.xlu0 %937
    %v940 = vmul.f32 %v933, %v938
    %942 = vrot.lane.b32.xlu0 %v940, 32
    %v943 = vpop.permute.xlu0 %942
    %v945 = vadd.f32 %v935, %v943
    %v946 = vtanh.pop %v945
    %948 = vrot.lane.b32.xlu0 %v946, 64
    %v949 = vpop.permute.xlu0 %948
    %v951 = vmul.f32 %v933, %v949
    %v952 = vld [vmem:[#allocation2 + $0xe] sm:$0x3]
    %954 = vrot.lane.b32.xlu0 %v951, 32
    %v955 = vpop.permute.xlu0 %954
    %v956 = vsel %vm226, %v955, 0
    %958 = vmatprep.subr.mxu0 0.0
    %959 = vmatpush1.msra.mxu0 0.0
    %960 = vmatprep.subr.mxu0 0.0
    %961 = vmatpush1.msra.mxu0 0.0
    %962 = vmatprep.subr.mxu0 0.0
    %963 = vmatpush1.msra.mxu0 0.0
    %964 = vmatprep.subr.mxu0 0.0
    %965 = vmatpush1.msra.mxu0 0.0
    %966 = vmatprep.subr.mxu0 0.0
    %967 = vmatpush1.msra.mxu0 0.0
    %968 = vmatprep.subr.mxu0 0.0
    %969 = vmatpush1.msra.mxu0 0.0
    %970 = vmatprep.subr.mxu0 0.0
    %971 = vmatpush1.msra.mxu0 0.0
    %972 = vmatprep.subr.mxu0 0.0
    %973 = vmatpush1.msra.mxu0 0.0
    %974 = vmatprep.subr.mxu0 0.0
    %975 = vmatpush1.msra.mxu0 0.0
    %976 = vmatprep.subr.mxu0 0.0
    %977 = vmatpush1.msra.mxu0 0.0
    %978 = vmatprep.subr.mxu0 0.0
    %979 = vmatpush1.msra.mxu0 0.0
    %980 = vmatprep.subr.mxu0 0.0
    %981 = vmatpush1.msra.mxu0 0.0
    %982 = vmatprep.subr.mxu0 0.0
    %983 = vmatpush1.msra.mxu0 %v224
    %984 = vmatprep.subr.mxu0 0.0
    %985 = vmatpush1.msra.mxu0 %v223
    %986 = vmatprep.subr.mxu0 0.0
    %987 = vmatpush1.msra.mxu0 %v222
    %988 = vmatprep.subr.mxu0 0.0
    %989 = vmatpush1.msra.mxu0 %v221
    %990 = vmatprep.subr.mxu0 0.0
    %991 = vmatpush2.msra.mxu0 0.0
    %992 = vmatprep.subr.mxu0 0.0
    %993 = vmatpush2.msra.mxu0 0.0
    %994 = vmatprep.subr.mxu0 0.0
    %995 = vmatpush2.msra.mxu0 0.0
    %996 = vmatprep.subr.mxu0 0.0
    %997 = vmatpush2.msra.mxu0 0.0
    %998 = vmatprep.subr.mxu0 0.0
    %999 = vmatpush2.msra.mxu0 0.0
    %1000 = vmatprep.subr.mxu0 0.0
    %1001 = vmatpush2.msra.mxu0 0.0
    %1002 = vmatprep.subr.mxu0 0.0
    %1003 = vmatpush2.msra.mxu0 0.0
    %1004 = vmatprep.subr.mxu0 0.0
    %1005 = vmatpush2.msra.mxu0 0.0
    %1006 = vmatprep.subr.mxu0 0.0
    %1007 = vmatpush2.msra.mxu0 0.0
    %1008 = vmatprep.subr.mxu0 0.0
    %1009 = vmatpush2.msra.mxu0 0.0
    %1010 = vmatprep.subr.mxu0 0.0
    %1011 = vmatpush2.msra.mxu0 0.0
    %1012 = vmatprep.subr.mxu0 0.0
    %1013 = vmatpush2.msra.mxu0 0.0
    %1014 = vmatprep.subr.mxu0 0.0
    %1015 = vmatpush2.msra.mxu0 0.0
    %1016 = vmatprep.subr.mxu0 0.0
    %1017 = vmatpush2.msra.mxu0 0.0
    %1018 = vmatprep.subr.mxu0 0.0
    %1019 = vmatpush2.msra.mxu0 0.0
    %1020 = vmatprep.subr.mxu0 0.0
    %1021 = vmatpush2.msra.mxu0 0.0
    %1022 = vmatprep.mubr.f32.mxu0 0.0
    %1023 = vmatmul.mubr.f32.gmra.mxu0 %v956
    %v1024 = vpop.f32.mrf.mxu0
    %v1025 = vadd.f32 0.0, %v1024
    %v1026 = vpop.f32.mrf.mxu0
    %1027 = vdwg.mxu0
    %v1028 = vadd.f32 %v952, %v1025
    %v1029 = vxor.u32 %v1028, 2147483648
    %v1030 = vmul.f32 %v1029, 1.442695
    %v1031 = vpow.pop %v1030
    %v1032 = vadd.f32 %v1031, 1.0
    %v1033 = vrcp.pop %v1032
    %v1034 = vmul.f32 1.0, %v1033
    %v1035 = vtanh.pop %v1028
    %v1036 = vmul.f32 %v1034, %v945
    %1038 = vrot.lane.b32.xlu0 %v1035, 64
    %v1039 = vpop.permute.xlu0 %1038
    %v1041 = vmul.f32 %v1034, %v1039
    %1043 = vrot.lane.b32.xlu0 %v1041, 32
    %v1044 = vpop.permute.xlu0 %1043
    %v1046 = vadd.f32 %v1036, %v1044
    %v1047 = vtanh.pop %v1046
    %1049 = vrot.lane.b32.xlu0 %v1047, 64
    %v1050 = vpop.permute.xlu0 %1049
    %v1052 = vmul.f32 %v1034, %v1050
    %v1053 = vrot.slane %v850, 6
    %v1055 = vrot.slane %v951, 4
    %v1058 = vrot.slane %v1052, 2
    %v1060 = vsel %vm639, %v749, %v1053
    %v1061 = vsel %vm641, %v1060, %v1055
    %v1062 = vsel %vm643, %v1061, %v1058
    %1064 = vrot.lane.b32.xlu0 %v1062, 32
    %v1065 = vpop.permute.xlu0 %1064
    %1067 = vst.msk [vmem:[#allocation3 + $0x8] sm:$0xff] %vm226, %v1065
    %1068 = vrot.lane.b32.xlu0 %v1052, 32
    %v1069 = vpop.permute.xlu0 %1068
    %vm1071 = vcmask 254976
    %1072 = vst.msk [vmem:[#allocation6] sm:$0x3] %vm1071, %v1069
    %1074 = vrot.lane.b32.xlu0 %v1046, 96
    %v1075 = vpop.permute.xlu0 %1074
    %1077 = vst.msk [vmem:[#allocation8] sm:$0x3] %vm1071, %v1075
    %v1078 = vld [vmem:[#allocation3] sm:$0xff]
    %v1079 = vld [vmem:[#allocation3 + $0x8] sm:$0xff]
    %v1080 = vld [vmem:[%s6] sm:$0xff]
    %v1081 = vld [vmem:[%s6 + $0x8] sm:$0xff]
    %v1082 = vld [vmem:[%s6 + $0x10] sm:$0xff]
    %v1083 = vld [vmem:[%s6 + $0x18] sm:$0xff]
    %v1084 = vld [vmem:[%s7] sm:$0x1]
    %v1086 = vlaneseq
    %v1087 = vshrl.u32 %v1086, 7
    %v1088 = vsub.s32 0, %v1087
    %v1089 = vrot.slane %v1084, %v1088
    %v1092 = vsel %vm226, %v1078, 0
    %v1095 = vsel %vm226, %v1079, 0
    %1097 = vmatprep.subr.mxu0 0.0
    %1098 = vmatpush1.msra.mxu0 0.0
    %1099 = vmatprep.subr.mxu0 0.0
    %1100 = vmatpush1.msra.mxu0 0.0
    %1101 = vmatprep.subr.mxu0 0.0
    %1102 = vmatpush1.msra.mxu0 0.0
    %1103 = vmatprep.subr.mxu0 0.0
    %1104 = vmatpush1.msra.mxu0 0.0
    %1105 = vmatprep.subr.mxu0 0.0
    %1106 = vmatpush1.msra.mxu0 0.0
    %1107 = vmatprep.subr.mxu0 0.0
    %1108 = vmatpush1.msra.mxu0 0.0
    %1109 = vmatprep.subr.mxu0 0.0
    %1110 = vmatpush1.msra.mxu0 0.0
    %1111 = vmatprep.subr.mxu0 0.0
    %1112 = vmatpush1.msra.mxu0 0.0
    %1113 = vmatprep.subr.mxu0 0.0
    %1114 = vmatpush1.msra.mxu0 0.0
    %1115 = vmatprep.subr.mxu0 0.0
    %1116 = vmatpush1.msra.mxu0 0.0
    %1117 = vmatprep.subr.mxu0 0.0
    %1118 = vmatpush1.msra.mxu0 0.0
    %1119 = vmatprep.subr.mxu0 0.0
    %1120 = vmatpush1.msra.mxu0 0.0
    %1121 = vmatprep.subr.mxu0 0.0
    %1122 = vmatpush1.msra.mxu0 %v1083
    %1123 = vmatprep.subr.mxu0 0.0
    %1124 = vmatpush1.msra.mxu0 %v1082
    %1125 = vmatprep.subr.mxu0 0.0
    %1126 = vmatpush1.msra.mxu0 %v1081
    %1127 = vmatprep.subr.mxu0 0.0
    %1128 = vmatpush1.msra.mxu0 %v1080
    %1129 = vmatprep.subr.mxu0 0.0
    %1130 = vmatpush2.msra.mxu0 0.0
    %1131 = vmatprep.subr.mxu0 0.0
    %1132 = vmatpush2.msra.mxu0 0.0
    %1133 = vmatprep.subr.mxu0 0.0
    %1134 = vmatpush2.msra.mxu0 0.0
    %1135 = vmatprep.subr.mxu0 0.0
    %1136 = vmatpush2.msra.mxu0 0.0
    %1137 = vmatprep.subr.mxu0 0.0
    %1138 = vmatpush2.msra.mxu0 0.0
    %1139 = vmatprep.subr.mxu0 0.0
    %1140 = vmatpush2.msra.mxu0 0.0
    %1141 = vmatprep.subr.mxu0 0.0
    %1142 = vmatpush2.msra.mxu0 0.0
    %1143 = vmatprep.subr.mxu0 0.0
    %1144 = vmatpush2.msra.mxu0 0.0
    %1145 = vmatprep.subr.mxu0 0.0
    %1146 = vmatpush2.msra.mxu0 0.0
    %1147 = vmatprep.subr.mxu0 0.0
    %1148 = vmatpush2.msra.mxu0 0.0
    %1149 = vmatprep.subr.mxu0 0.0
    %1150 = vmatpush2.msra.mxu0 0.0
    %1151 = vmatprep.subr.mxu0 0.0
    %1152 = vmatpush2.msra.mxu0 0.0
    %1153 = vmatprep.subr.mxu0 0.0
    %1154 = vmatpush2.msra.mxu0 0.0
    %1155 = vmatprep.subr.mxu0 0.0
    %1156 = vmatpush2.msra.mxu0 0.0
    %1157 = vmatprep.subr.mxu0 0.0
    %1158 = vmatpush2.msra.mxu0 0.0
    %1159 = vmatprep.subr.mxu0 0.0
    %1160 = vmatpush2.msra.mxu0 0.0
    %1161 = vmatprep.mubr.f32.mxu0 0.0
    %1162 = vmatmul.mubr.f32.gmra.mxu0 %v1092
    %v1163 = vpop.f32.mrf.mxu0
    %v1164 = vadd.f32 %v1089, %v1163
    %v1165 = vpop.f32.mrf.mxu0
    %1166 = vmatprep.mubr.f32.mxu0 0.0
    %1167 = vmatmul.mubr.f32.gmra.mxu0 %v1095
    %v1168 = vpop.f32.mrf.mxu0
    %v1169 = vadd.f32 %v1089, %v1168
    %v1170 = vpop.f32.mrf.mxu0
    %1171 = vdwg.mxu0
    %v1172 = vsel %vm52, %v1164, -inf
    %1173 = vmax.xlane.f32.xlu0 %v1172
    %v1174 = vpop.xlane.xlu0 %1173
    %v1175 = vsel %vm52, %v1169, -inf
    %1176 = vmax.xlane.f32.xlu0 %v1175
    %v1177 = vpop.xlane.xlu0 %1176
    %v1178 = vsub.f32 %v1164, %v1174
    %v1179 = vsub.f32 %v1169, %v1177
    %v1180 = vmul.f32 %v1178, 1.442695
    %v1181 = vpow.pop %v1180
    %v1182 = vmul.f32 %v1179, 1.442695
    %v1183 = vpow.pop %v1182
    %v1184 = vsel %vm52, %v1181, 0.0
    %1185 = vadd.xlane.f32.xlu0 %v1184
    %v1186 = vpop.xlane.xlu0 %1185
    %v1187 = vsel %vm52, %v1183, 0.0
    %1188 = vadd.xlane.f32.xlu0 %v1187
    %v1189 = vpop.xlane.xlu0 %1188
    %v1190 = vlog2.pop %v1186
    %v1191 = vmul.f32 %v1190, 0.6931472
    %v1192 = vlog2.pop %v1189
    %v1193 = vmul.f32 %v1192, 0.6931472
    %v1194 = vsub.f32 %v1178, %v1191
    %v1195 = vsub.f32 %v1179, %v1193
    %1196 = vst.msk [vmem:[#allocation4] sm:$0xff] %vm52, %v1194
    %1197 = vst.msk [vmem:[#allocation4 + $0x8] sm:$0xff] %vm52, %v1195
    // Predicated region
    $region34: #{tpu_custom_call.1} parent=1 // pred_check
      _
    $region35: #{tpu_custom_call.1} parent=1 // pred_check_branch
      %1199 = sbr.rel (0) target = $region37
    $region36: #{tpu_custom_call.1} parent=1 // pred_region
      %s1201 = ssub.s32 256, 256
      %1202 = vsyncadd [#allocation5], %s1201
      %s1203 = sshll.u32 [#allocation4], 4
      %s1204 = int_to_ptr.vmem [resolvable:$true] %s1203
      %1209 = dma.vmem_to_hbm [thread:$0]  %s1204, 256, %s8, [#allocation5], 128, 128, 8
    $region37: #{tpu_custom_call.1} parent=1 // pred_fallthru
      _
    // Predicated region
    $region38: #{tpu_custom_call.1} parent=1 // pred_check
      _
    $region39: #{tpu_custom_call.1} parent=1 // pred_check_branch
      %1211 = sbr.rel (0) target = $region41
    $region40: #{tpu_custom_call.1} parent=1 // pred_region
      %s1213 = ssub.s32 32, 32
      %1214 = vsyncadd [#allocation7], %s1213
      %s1216 = sshll.u32 [#allocation6], 4
      %s1217 = int_to_ptr.vmem [resolvable:$true] %s1216
      %1219 = dma.vmem_to_hbm [thread:$0]  %s1217, 32, %s9, [#allocation7]
    $region41: #{tpu_custom_call.1} parent=1 // pred_fallthru
      _
    // Predicated region
    $region42: #{tpu_custom_call.1} parent=1 // pred_check
      _
    $region43: #{tpu_custom_call.1} parent=1 // pred_check_branch
      %1221 = sbr.rel (0) target = $region45
    $region44: #{tpu_custom_call.1} parent=1 // pred_region
      %s1223 = ssub.s32 32, 32
      %1224 = vsyncadd [#allocation7], %s1223
      %s1226 = sshll.u32 [#allocation8], 4
      %s1227 = int_to_ptr.vmem [resolvable:$true] %s1226
      %1229 = dma.vmem_to_hbm [thread:$0]  %s1227, 32, %s10, [#allocation7]
    $region45: #{tpu_custom_call.1} parent=1 // pred_fallthru
      _
    // Predicated region
    $region46: #{tpu_custom_call.1} parent=1 // pred_check
      _
    $region47: #{tpu_custom_call.1} parent=1 // pred_check_branch
      %1231 = sbr.rel (0) target = $region49
    $region48: #{tpu_custom_call.1} parent=1 // pred_region
      %1232 = dma.done [#allocation5], 256
    $region49: #{tpu_custom_call.1} parent=1 // pred_fallthru
      _
    // Predicated region
    $region50: #{tpu_custom_call.1} parent=1 // pred_check
      _
    $region51: #{tpu_custom_call.1} parent=1 // pred_check_branch
      %1234 = sbr.rel (0) target = $region53
    $region52: #{tpu_custom_call.1} parent=1 // pred_region
      %1235 = dma.done [#allocation7], 32
    $region53: #{tpu_custom_call.1} parent=1 // pred_fallthru
      _
    // Predicated region
    $region54: #{tpu_custom_call.1} parent=1 // pred_check
      _
    $region55: #{tpu_custom_call.1} parent=1 // pred_check_branch
      %1237 = sbr.rel (0) target = $region57
    $region56: #{tpu_custom_call.1} parent=1 // pred_region
      %1238 = dma.done [#allocation7], 32
    $region57: #{tpu_custom_call.1} parent=1 // pred_fallthru
      _
    %1239 = vsyncpa [#allocation5], 1
    %1240 = vsyncpa [#allocation7], 1

</llo_original>
